<compile_context>
chip_gen: v7x
topology: tpu7x:2x2x1
jax: 0.10.0
libtpu: 0.0.40
codegen_flags: <defaults>
</compile_context>

<pallas_src>
import math

import jax
import jax.numpy as jnp
from jax.experimental import pallas as pl
from jax.experimental.pallas import tpu as pltpu

# ---------------- configuration (matches the nn.Module defaults) ----------------
B = 2            # batch
S0 = 40          # original sequence length
E = 4            # embedding_size (d_model)
H = 2            # num_heads
DH = E // H      # head dim
FF = 64          # intermediate_size (dim_feedforward)
NUM_LAYERS = 2   # encoder layers
L = 5            # label_num = len(id2labels)
PATCH = 10       # patch_size
LN_EPS = 1e-5    # PyTorch LayerNorm / TransformerEncoderLayer default eps
NEG_INF = -1e9   # additive key-padding / cross-batch mask value
LANES = 128      # lane width for the packed slab / lane-dense output


def _layer_norm(x, g, b):
    mu = jnp.mean(x, axis=-1, keepdims=True)
    var = jnp.mean((x - mu) ** 2, axis=-1, keepdims=True)
    return (x - mu) * jax.lax.rsqrt(var + LN_EPS) * g + b


def positional_encoding(seq_len, emb):
    pos = jnp.arange(seq_len, dtype=jnp.float32)[:, None]
    div = jnp.exp(jnp.arange(0, emb, 2, dtype=jnp.float32) * -(math.log(10000.0) / emb))
    pe = jnp.zeros((seq_len, emb), jnp.float32)
    pe = pe.at[:, 0::2].set(jnp.sin(pos * div))
    pe = pe.at[:, 1::2].set(jnp.cos(pos * div))
    return pe                                        # (seq_len, emb)


def init_params(key):
    ks = jax.random.split(key, 8)
    s = 0.05
    f32 = jnp.float32
    return dict(
        ng=jnp.ones((1, E), f32), nb=jnp.zeros((1, E), f32),
        wqkv=(jax.random.normal(ks[0], (NUM_LAYERS, 3 * E, E)) * s).astype(f32),
        bqkv=jnp.zeros((NUM_LAYERS, 3 * E), f32),
        wo=(jax.random.normal(ks[1], (NUM_LAYERS, E, E)) * s).astype(f32),
        bo=jnp.zeros((NUM_LAYERS, E), f32),
        w1=(jax.random.normal(ks[2], (NUM_LAYERS, FF, E)) * s).astype(f32),
        b1=jnp.zeros((NUM_LAYERS, FF), f32),
        w2=(jax.random.normal(ks[3], (NUM_LAYERS, E, FF)) * s).astype(f32),
        b2=jnp.zeros((NUM_LAYERS, E), f32),
        ln1g=jnp.ones((NUM_LAYERS, E), f32), ln1b=jnp.zeros((NUM_LAYERS, E), f32),
        ln2g=jnp.ones((NUM_LAYERS, E), f32), ln2b=jnp.zeros((NUM_LAYERS, E), f32),
        wc=(jax.random.normal(ks[4], (L, E)) * s).astype(f32),
        bc=jnp.zeros((L,), f32),
    )


def build_seqxgpt_forward(params, batch, seq_len, patch_size=PATCH):
    """One-time builder: packs all constants/weights into a single VMEM slab and
    returns a cached, jitted per-call forward(inputs, labels)."""
    b, s0 = batch, seq_len
    pad = (patch_size - s0 % patch_size) % patch_size
    s_pad = s0 + pad
    p = s_pad // patch_size
    bp = b * p
    bsp = b * s_pad
    f32 = jnp.float32

    # ----------------- static slab layout (8-row aligned slots) -----------------
    slots = {}
    nrows = 0

    def alloc(name, r, c):
        nonlocal nrows
        slots[name] = (nrows, r, c)
        nrows += -(-r // 8) * 8

    alloc('avg', bp, bsp)          # block-diag patch averaging matrix
    alloc('pe', bp, E)             # tiled positional encoding
    alloc('ng', bp, E)             # self.norm gamma (pre-broadcast)
    alloc('nb', bp, E)             # self.norm beta
    alloc('sb', bp, bp)            # same-batch additive mask (0 / NEG_INF)
    for l in range(NUM_LAYERS):
        alloc(f'wqkv{l}', E, 3 * E)
        alloc(f'bqkv{l}', bp, 3 * E)
        alloc(f'wo{l}', E, E)
        alloc(f'bo{l}', bp, E)
        alloc(f'ln1g{l}', bp, E)
        alloc(f'ln1b{l}', bp, E)
        alloc(f'w1{l}', E, FF)
        alloc(f'b1{l}', bp, FF)
        alloc(f'w2{l}', FF, E)
        alloc(f'b2{l}', bp, E)
        alloc(f'ln2g{l}', bp, E)
        alloc(f'ln2b{l}', bp, E)
    alloc('wc', E, LANES)          # classifier weight, lane-dense padded
    alloc('bc', bp, LANES)         # classifier bias, lane-dense padded
    total_rows = nrows

    # ----------------- build the constant slab ONCE (host / one-time XLA) -------
    slab = jnp.zeros((total_rows, LANES), f32)

    def put(s, name, arr):
        arr = jnp.asarray(arr, f32)
        r0, _, _ = slots[name]
        return s.at[r0:r0 + arr.shape[0], :arr.shape[1]].set(arr)

    # patch-average matrix: mean over patch_size incl. zero padding (== pad-then-mean)
    row_b = jnp.repeat(jnp.arange(b), p)
    col_b = jnp.repeat(jnp.arange(b), s_pad)
    row_p = jnp.tile(jnp.arange(p), b)
    col_p = jnp.tile(jnp.arange(s_pad) // patch_size, b)
    avg = ((row_b[:, None] == col_b[None, :]) &
           (row_p[:, None] == col_p[None, :])).astype(f32) / patch_size
    slab = put(slab, 'avg', avg)
    slab = put(slab, 'pe', jnp.tile(positional_encoding(p, E), (b, 1)))
    slab = put(slab, 'ng', jnp.broadcast_to(params['ng'], (bp, E)))
    slab = put(slab, 'nb', jnp.broadcast_to(params['nb'], (bp, E)))
    slab = put(slab, 'sb', jnp.where(row_b[:, None] == row_b[None, :], 0.0, NEG_INF))

    for l in range(NUM_LAYERS):
        slab = put(slab, f'wqkv{l}', params['wqkv'][l].T)                        # (E, 3E)
        slab = put(slab, f'bqkv{l}', jnp.broadcast_to(params['bqkv'][l][None, :], (bp, 3 * E)))
        slab = put(slab, f'wo{l}', params['wo'][l].T)                            # (E, E)
        slab = put(slab, f'bo{l}', jnp.broadcast_to(params['bo'][l][None, :], (bp, E)))
        slab = put(slab, f'ln1g{l}', jnp.broadcast_to(params['ln1g'][l][None, :], (bp, E)))
        slab = put(slab, f'ln1b{l}', jnp.broadcast_to(params['ln1b'][l][None, :], (bp, E)))
        slab = put(slab, f'w1{l}', params['w1'][l].T)                            # (E, FF)
        slab = put(slab, f'b1{l}', jnp.broadcast_to(params['b1'][l][None, :], (bp, FF)))
        slab = put(slab, f'w2{l}', params['w2'][l].T)                            # (FF, E)
        slab = put(slab, f'b2{l}', jnp.broadcast_to(params['b2'][l][None, :], (bp, E)))
        slab = put(slab, f'ln2g{l}', jnp.broadcast_to(params['ln2g'][l][None, :], (bp, E)))
        slab = put(slab, f'ln2b{l}', jnp.broadcast_to(params['ln2b'][l][None, :], (bp, E)))

    slab = put(slab, 'wc', params['wc'].T)                                       # (E, L) -> zero-padded lanes
    slab = put(slab, 'bc', jnp.broadcast_to(params['bc'][None, :], (bp, L)))
    slab = jax.block_until_ready(slab)

    # ----------------- the kernel (closes over static layout) -------------------
    def kernel(w_ref, x_ref, kv_ref, out_ref):
        def W(name):
            r0, r, c = slots[name]
            return w_ref[r0:r0 + r, :c]          # free static VMEM slice

        # patch_average as ONE matmul: (BP, B*S_pad) @ (B*S_pad, E)
        h = jnp.dot(W('avg'), x_ref[...], preferred_element_type=jnp.float32)
        # + positional encoding, then self.norm
        h = _layer_norm(h + W('pe'), W('ng'), W('nb'))

        # additive mask over the flat slab: same-batch block + key-padding columns
        amask = W('sb') + jnp.where(kv_ref[...] > 0.5, 0.0, NEG_INF)   # (BP, BP)
        scale = 1.0 / math.sqrt(DH)

        for l in range(NUM_LAYERS):
            # fused QKV projection: one (BP,E)@(E,3E) matmul, pre-broadcast bias
            qkv = jnp.dot(h, W(f'wqkv{l}'), preferred_element_type=jnp.float32) + W(f'bqkv{l}')
            heads = []
            for hh in range(H):                 # static lane slices of the fused result
                qh = qkv[:, hh * DH:(hh + 1) * DH]
                kh = qkv[:, E + hh * DH:E + (hh + 1) * DH]
                vh = qkv[:, 2 * E + hh * DH:2 * E + (hh + 1) * DH]

                s = jnp.dot(qh, kh.T, preferred_element_type=jnp.float32) * scale + amask
                s = s - jnp.max(s, axis=-1, keepdims=True)     # keep: guards fully-masked rows
                p_attn = jnp.exp(s)
                p_attn = p_attn / jnp.sum(p_attn, axis=-1, keepdims=True)
                heads.append(jnp.dot(p_attn, vh, preferred_element_type=jnp.float32))
            # lane-concat heads, ONE output-projection matmul
            attn = jnp.dot(jnp.concatenate(heads, axis=-1), W(f'wo{l}'),
                           preferred_element_type=jnp.float32) + W(f'bo{l}')
            h = _layer_norm(h + attn, W(f'ln1g{l}'), W(f'ln1b{l}'))

            ff = jnp.dot(h, W(f'w1{l}'), preferred_element_type=jnp.float32) + W(f'b1{l}')
            ff = jnp.maximum(ff, 0.0)
            ff = jnp.dot(ff, W(f'w2{l}'), preferred_element_type=jnp.float32) + W(f'b2{l}')
            h = _layer_norm(h + ff, W(f'ln2g{l}'), W(f'ln2b{l}'))

        # classifier: lane-dense (BP, 128) store; real logits live in lanes [:L]
        out_ref[...] = jnp.dot(h, W('wc'), preferred_element_type=jnp.float32) + W('bc')

    call = pl.pallas_call(
        kernel,
        out_shape=jax.ShapeDtypeStruct((bp, LANES), f32),
        in_specs=[pl.BlockSpec(memory_space=pltpu.MemorySpace.VMEM)] * 3,
        out_specs=pl.BlockSpec(memory_space=pltpu.MemorySpace.VMEM),
    )

    # ----------------- cached per-call wrapper -----------------------------------
    @jax.jit
    def forward(inputs, labels):
        """inputs: (B, S0, E) float32 ; labels: (B, S0) int32 with -1 = padding."""
        x_pad = jnp.pad(inputs.astype(f32), ((0, 0), (0, pad), (0, 0)))          # F.pad zeros
        x_flat = x_pad.reshape(bsp, E)

        labels_pad = jnp.pad(labels, ((0, 0), (0, pad)), constant_values=-1)
        labels_patched = labels_pad.reshape(b, p, patch_size)
        patch_mask = (labels_patched > -1).any(axis=2)                            # (B, P)
        proc_labels = labels_patched[:, :, 0]                                     # (B, P)
        key_valid = patch_mask.reshape(1, bp).astype(f32)                         # (1, BP)

        logits_pad = call(slab, x_flat, key_valid)                                # (BP, 128)
        logits = logits_pad[:, :L].reshape(b, p, L)

        # TODO(synk): fastNLP ConditionalRandomField.viterbi_decode (allowed_transitions
        # constrained decoding) has no clean Pallas equivalent; with trans_m zeroed we
        # approximate decoding with a masked per-position argmax outside the kernel.
        preds = jnp.argmax(logits, axis=-1).astype(jnp.int32)
        preds = jnp.where(patch_mask, preds, -1)
        return {'preds': preds, 'logits': logits, 'proc_labels': proc_labels}

    return forward


if __name__ == "__main__":
    key = jax.random.PRNGKey(0)
    k_in, k_lab, k_par = jax.random.split(key, 3)

    inputs = jax.random.normal(k_in, (B, S0, E), dtype=jnp.float32)
    # labels: valid tags for a prefix of each sequence, -1 padding afterwards
    lengths = jnp.array([S0, 25], dtype=jnp.int32)
    raw_labels = jax.random.randint(k_lab, (B, S0), 0, L, dtype=jnp.int32)
    pos_ids = jnp.arange(S0, dtype=jnp.int32)[None, :]
    labels = jnp.where(pos_ids < lengths[:, None], raw_labels, -1)

    params = init_params(k_par)

    forward = build_seqxgpt_forward(params, B, S0)   # one-time: slab + kernel closure
    out = forward(inputs, labels)
    jax.block_until_ready(out['logits'])
    jax.block_until_ready(out['preds'])

    assert out['logits'].shape == (B, S0 // PATCH, L)
    assert out['preds'].shape == (B, S0 // PATCH)
    assert out['proc_labels'].shape == (B, S0 // PATCH)
    assert bool(jnp.all(jnp.isfinite(out['logits'])))
    print("KERNEL_OK")
</pallas_src>

<mosaic_0001>
module attributes {stable_mosaic.version = 11 : i64} {
  func.func @kernel(%arg0: memref<360x128xf32, #tpu.memory_space<vmem>>, %arg1: memref<80x4xf32, #tpu.memory_space<vmem>>, %arg2: memref<1x8xf32, #tpu.memory_space<vmem>>, %arg3: memref<8x128xf32, #tpu.memory_space<vmem>>) attributes {dimension_semantics = [], scalar_prefetch = 0 : i64, scratch_operands = 0 : i64, tpu.core_type = #tpu.core_type<tc>} {
    %c0 = arith.constant 0 : index
    %c0_0 = arith.constant 0 : index
    %0 = vector.load %arg0[%c0, %c0_0] : memref<360x128xf32, #tpu.memory_space<vmem>>, vector<8x80xf32>
    %c0_1 = arith.constant 0 : index
    %c0_2 = arith.constant 0 : index
    %1 = vector.load %arg1[%c0_1, %c0_2] : memref<80x4xf32, #tpu.memory_space<vmem>>, vector<80x4xf32>
    %cst = arith.constant dense<0.000000e+00> : vector<8x4xf32>
    %2 = tpu.matmul %0, %1, %cst {dimension_numbers = #tpu.dot_dimension_numbers<[1], [0], [0], [1], [0, 0, 1, 1], [], []>} : vector<8x80xf32>, vector<80x4xf32>, vector<8x4xf32> -> vector<8x4xf32>
    %c8 = arith.constant 8 : index
    %c0_3 = arith.constant 0 : index
    %3 = vector.load %arg0[%c8, %c0_3] : memref<360x128xf32, #tpu.memory_space<vmem>>, vector<8x4xf32>
    %4 = arith.addf %2, %3 : vector<8x4xf32>
    %c16 = arith.constant 16 : index
    %c0_4 = arith.constant 0 : index
    %5 = vector.load %arg0[%c16, %c0_4] : memref<360x128xf32, #tpu.memory_space<vmem>>, vector<8x4xf32>
    %c24 = arith.constant 24 : index
    %c0_5 = arith.constant 0 : index
    %6 = vector.load %arg0[%c24, %c0_5] : memref<360x128xf32, #tpu.memory_space<vmem>>, vector<8x4xf32>
    %cst_6 = arith.constant dense<0.000000e+00> : vector<8xf32>
    %7 = vector.multi_reduction <add>, %4, %cst_6 [1] : vector<8x4xf32> to vector<8xf32>
    %8 = vector.shape_cast %7 : vector<8xf32> to vector<8x1xf32>
    %cst_7 = arith.constant 4.000000e+00 : f32
    %9 = vector.broadcast %cst_7 : f32 to vector<8x1xf32>
    %10 = arith.divf %8, %9 : vector<8x1xf32>
    %11 = vector.broadcast %10 : vector<8x1xf32> to vector<8x4xf32>
    %12 = arith.subf %4, %11 : vector<8x4xf32>
    %13 = arith.mulf %12, %12 : vector<8x4xf32>
    %cst_8 = arith.constant dense<0.000000e+00> : vector<8xf32>
    %14 = vector.multi_reduction <add>, %13, %cst_8 [1] : vector<8x4xf32> to vector<8xf32>
    %15 = vector.shape_cast %14 : vector<8xf32> to vector<8x1xf32>
    %cst_9 = arith.constant 4.000000e+00 : f32
    %16 = vector.broadcast %cst_9 : f32 to vector<8x1xf32>
    %17 = arith.divf %15, %16 : vector<8x1xf32>
    %18 = vector.broadcast %10 : vector<8x1xf32> to vector<8x4xf32>
    %19 = arith.subf %4, %18 : vector<8x4xf32>
    %cst_10 = arith.constant 9.99999974E-6 : f32
    %20 = vector.broadcast %cst_10 : f32 to vector<8x1xf32>
    %21 = arith.addf %17, %20 : vector<8x1xf32>
    %22 = math.rsqrt %21 : vector<8x1xf32>
    %23 = vector.broadcast %22 : vector<8x1xf32> to vector<8x4xf32>
    %24 = arith.mulf %19, %23 : vector<8x4xf32>
    %25 = arith.mulf %24, %5 : vector<8x4xf32>
    %26 = arith.addf %25, %6 : vector<8x4xf32>
    %c32 = arith.constant 32 : index
    %c0_11 = arith.constant 0 : index
    %27 = vector.load %arg0[%c32, %c0_11] : memref<360x128xf32, #tpu.memory_space<vmem>>, vector<8x8xf32>
    %c0_12 = arith.constant 0 : index
    %c0_13 = arith.constant 0 : index
    %28 = vector.load %arg2[%c0_12, %c0_13] : memref<1x8xf32, #tpu.memory_space<vmem>>, vector<1x8xf32>
    %cst_14 = arith.constant 5.000000e-01 : f32
    %29 = vector.broadcast %cst_14 : f32 to vector<1x8xf32>
    %30 = arith.cmpf ogt, %28, %29 : vector<1x8xf32>
    %cst_15 = arith.constant 0.000000e+00 : f32
    %cst_16 = arith.constant -1.000000e+09 : f32
    %31 = vector.broadcast %cst_15 : f32 to vector<1x8xf32>
    %32 = vector.broadcast %cst_16 : f32 to vector<1x8xf32>
    %33 = arith.select %30, %31, %32 : vector<1x8xi1>, vector<1x8xf32>
    %34 = vector.broadcast %33 : vector<1x8xf32> to vector<8x8xf32>
    %35 = arith.addf %27, %34 : vector<8x8xf32>
    %c40 = arith.constant 40 : index
    %c0_17 = arith.constant 0 : index
    %36 = vector.load %arg0[%c40, %c0_17] : memref<360x128xf32, #tpu.memory_space<vmem>>, vector<4x12xf32>
    %cst_18 = arith.constant dense<0.000000e+00> : vector<8x12xf32>
    %37 = tpu.matmul %26, %36, %cst_18 {dimension_numbers = #tpu.dot_dimension_numbers<[1], [0], [0], [1], [0, 0, 1, 1], [], []>} : vector<8x4xf32>, vector<4x12xf32>, vector<8x12xf32> -> vector<8x12xf32>
    %c48 = arith.constant 48 : index
    %c0_19 = arith.constant 0 : index
    %38 = vector.load %arg0[%c48, %c0_19] : memref<360x128xf32, #tpu.memory_space<vmem>>, vector<8x12xf32>
    %39 = arith.addf %37, %38 : vector<8x12xf32>
    %40 = vector.extract_strided_slice %39 {offsets = [0, 0], sizes = [8, 2], strides = [1, 1]} : vector<8x12xf32> to vector<8x2xf32>
    %41 = vector.extract_strided_slice %39 {offsets = [0, 4], sizes = [8, 2], strides = [1, 1]} : vector<8x12xf32> to vector<8x2xf32>
    %42 = vector.extract_strided_slice %39 {offsets = [0, 8], sizes = [8, 2], strides = [1, 1]} : vector<8x12xf32> to vector<8x2xf32>
    %43 = tpu.transpose %41, [1, 0] : vector<8x2xf32> -> vector<2x8xf32>
    %cst_20 = arith.constant dense<0.000000e+00> : vector<8x8xf32>
    %44 = tpu.matmul %40, %43, %cst_20 {dimension_numbers = #tpu.dot_dimension_numbers<[1], [0], [0], [1], [0, 0, 1, 1], [], []>} : vector<8x2xf32>, vector<2x8xf32>, vector<8x8xf32> -> vector<8x8xf32>
    %cst_21 = arith.constant 0.707106769 : f32
    %45 = vector.broadcast %cst_21 : f32 to vector<8x8xf32>
    %46 = arith.mulf %44, %45 : vector<8x8xf32>
    %47 = arith.addf %46, %35 : vector<8x8xf32>
    %cst_22 = arith.constant dense<0xFF800000> : vector<8xf32>
    %48 = vector.multi_reduction <maximumf>, %47, %cst_22 [1] : vector<8x8xf32> to vector<8xf32>
    %49 = vector.shape_cast %48 : vector<8xf32> to vector<8x1xf32>
    %50 = vector.broadcast %49 : vector<8x1xf32> to vector<8x8xf32>
    %51 = arith.subf %47, %50 : vector<8x8xf32>
    %52 = math.exp %51 : vector<8x8xf32>
    %cst_23 = arith.constant dense<0.000000e+00> : vector<8xf32>
    %53 = vector.multi_reduction <add>, %52, %cst_23 [1] : vector<8x8xf32> to vector<8xf32>
    %54 = vector.shape_cast %53 : vector<8xf32> to vector<8x1xf32>
    %55 = vector.broadcast %54 : vector<8x1xf32> to vector<8x8xf32>
    %56 = arith.divf %52, %55 : vector<8x8xf32>
    %cst_24 = arith.constant dense<0.000000e+00> : vector<8x2xf32>
    %57 = tpu.matmul %56, %42, %cst_24 {dimension_numbers = #tpu.dot_dimension_numbers<[1], [0], [0], [1], [0, 0, 1, 1], [], []>} : vector<8x8xf32>, vector<8x2xf32>, vector<8x2xf32> -> vector<8x2xf32>
    %58 = vector.extract_strided_slice %39 {offsets = [0, 2], sizes = [8, 2], strides = [1, 1]} : vector<8x12xf32> to vector<8x2xf32>
    %59 = vector.extract_strided_slice %39 {offsets = [0, 6], sizes = [8, 2], strides = [1, 1]} : vector<8x12xf32> to vector<8x2xf32>
    %60 = vector.extract_strided_slice %39 {offsets = [0, 10], sizes = [8, 2], strides = [1, 1]} : vector<8x12xf32> to vector<8x2xf32>
    %61 = tpu.transpose %59, [1, 0] : vector<8x2xf32> -> vector<2x8xf32>
    %cst_25 = arith.constant dense<0.000000e+00> : vector<8x8xf32>
    %62 = tpu.matmul %58, %61, %cst_25 {dimension_numbers = #tpu.dot_dimension_numbers<[1], [0], [0], [1], [0, 0, 1, 1], [], []>} : vector<8x2xf32>, vector<2x8xf32>, vector<8x8xf32> -> vector<8x8xf32>
    %cst_26 = arith.constant 0.707106769 : f32
    %63 = vector.broadcast %cst_26 : f32 to vector<8x8xf32>
    %64 = arith.mulf %62, %63 : vector<8x8xf32>
    %65 = arith.addf %64, %35 : vector<8x8xf32>
    %cst_27 = arith.constant dense<0xFF800000> : vector<8xf32>
    %66 = vector.multi_reduction <maximumf>, %65, %cst_27 [1] : vector<8x8xf32> to vector<8xf32>
    %67 = vector.shape_cast %66 : vector<8xf32> to vector<8x1xf32>
    %68 = vector.broadcast %67 : vector<8x1xf32> to vector<8x8xf32>
    %69 = arith.subf %65, %68 : vector<8x8xf32>
    %70 = math.exp %69 : vector<8x8xf32>
    %cst_28 = arith.constant dense<0.000000e+00> : vector<8xf32>
    %71 = vector.multi_reduction <add>, %70, %cst_28 [1] : vector<8x8xf32> to vector<8xf32>
    %72 = vector.shape_cast %71 : vector<8xf32> to vector<8x1xf32>
    %73 = vector.broadcast %72 : vector<8x1xf32> to vector<8x8xf32>
    %74 = arith.divf %70, %73 : vector<8x8xf32>
    %cst_29 = arith.constant dense<0.000000e+00> : vector<8x2xf32>
    %75 = tpu.matmul %74, %60, %cst_29 {dimension_numbers = #tpu.dot_dimension_numbers<[1], [0], [0], [1], [0, 0, 1, 1], [], []>} : vector<8x8xf32>, vector<8x2xf32>, vector<8x2xf32> -> vector<8x2xf32>
    %76 = tpu.concatenate %57, %75 in 1 : vector<8x2xf32>, vector<8x2xf32> -> vector<8x4xf32>
    %c56 = arith.constant 56 : index
    %c0_30 = arith.constant 0 : index
    %77 = vector.load %arg0[%c56, %c0_30] : memref<360x128xf32, #tpu.memory_space<vmem>>, vector<4x4xf32>
    %cst_31 = arith.constant dense<0.000000e+00> : vector<8x4xf32>
    %78 = tpu.matmul %76, %77, %cst_31 {dimension_numbers = #tpu.dot_dimension_numbers<[1], [0], [0], [1], [0, 0, 1, 1], [], []>} : vector<8x4xf32>, vector<4x4xf32>, vector<8x4xf32> -> vector<8x4xf32>
    %c64 = arith.constant 64 : index
    %c0_32 = arith.constant 0 : index
    %79 = vector.load %arg0[%c64, %c0_32] : memref<360x128xf32, #tpu.memory_space<vmem>>, vector<8x4xf32>
    %80 = arith.addf %78, %79 : vector<8x4xf32>
    %81 = arith.addf %26, %80 : vector<8x4xf32>
    %c72 = arith.constant 72 : index
    %c0_33 = arith.constant 0 : index
    %82 = vector.load %arg0[%c72, %c0_33] : memref<360x128xf32, #tpu.memory_space<vmem>>, vector<8x4xf32>
    %c80 = arith.constant 80 : index
    %c0_34 = arith.constant 0 : index
    %83 = vector.load %arg0[%c80, %c0_34] : memref<360x128xf32, #tpu.memory_space<vmem>>, vector<8x4xf32>
    %cst_35 = arith.constant dense<0.000000e+00> : vector<8xf32>
    %84 = vector.multi_reduction <add>, %81, %cst_35 [1] : vector<8x4xf32> to vector<8xf32>
    %85 = vector.shape_cast %84 : vector<8xf32> to vector<8x1xf32>
    %cst_36 = arith.constant 4.000000e+00 : f32
    %86 = vector.broadcast %cst_36 : f32 to vector<8x1xf32>
    %87 = arith.divf %85, %86 : vector<8x1xf32>
    %88 = vector.broadcast %87 : vector<8x1xf32> to vector<8x4xf32>
    %89 = arith.subf %81, %88 : vector<8x4xf32>
    %90 = arith.mulf %89, %89 : vector<8x4xf32>
    %cst_37 = arith.constant dense<0.000000e+00> : vector<8xf32>
    %91 = vector.multi_reduction <add>, %90, %cst_37 [1] : vector<8x4xf32> to vector<8xf32>
    %92 = vector.shape_cast %91 : vector<8xf32> to vector<8x1xf32>
    %cst_38 = arith.constant 4.000000e+00 : f32
    %93 = vector.broadcast %cst_38 : f32 to vector<8x1xf32>
    %94 = arith.divf %92, %93 : vector<8x1xf32>
    %95 = vector.broadcast %87 : vector<8x1xf32> to vector<8x4xf32>
    %96 = arith.subf %81, %95 : vector<8x4xf32>
    %cst_39 = arith.constant 9.99999974E-6 : f32
    %97 = vector.broadcast %cst_39 : f32 to vector<8x1xf32>
    %98 = arith.addf %94, %97 : vector<8x1xf32>
    %99 = math.rsqrt %98 : vector<8x1xf32>
    %100 = vector.broadcast %99 : vector<8x1xf32> to vector<8x4xf32>
    %101 = arith.mulf %96, %100 : vector<8x4xf32>
    %102 = arith.mulf %101, %82 : vector<8x4xf32>
    %103 = arith.addf %102, %83 : vector<8x4xf32>
    %c88 = arith.constant 88 : index
    %c0_40 = arith.constant 0 : index
    %104 = vector.load %arg0[%c88, %c0_40] : memref<360x128xf32, #tpu.memory_space<vmem>>, vector<4x64xf32>
    %cst_41 = arith.constant dense<0.000000e+00> : vector<8x64xf32>
    %105 = tpu.matmul %103, %104, %cst_41 {dimension_numbers = #tpu.dot_dimension_numbers<[1], [0], [0], [1], [0, 0, 1, 1], [], []>} : vector<8x4xf32>, vector<4x64xf32>, vector<8x64xf32> -> vector<8x64xf32>
    %c96 = arith.constant 96 : index
    %c0_42 = arith.constant 0 : index
    %106 = vector.load %arg0[%c96, %c0_42] : memref<360x128xf32, #tpu.memory_space<vmem>>, vector<8x64xf32>
    %107 = arith.addf %105, %106 : vector<8x64xf32>
    %cst_43 = arith.constant 0.000000e+00 : f32
    %108 = vector.broadcast %cst_43 : f32 to vector<8x64xf32>
    %109 = arith.maximumf %107, %108 : vector<8x64xf32>
    %c104 = arith.constant 104 : index
    %c0_44 = arith.constant 0 : index
    %110 = vector.load %arg0[%c104, %c0_44] : memref<360x128xf32, #tpu.memory_space<vmem>>, vector<64x4xf32>
    %cst_45 = arith.constant dense<0.000000e+00> : vector<8x4xf32>
    %111 = tpu.matmul %109, %110, %cst_45 {dimension_numbers = #tpu.dot_dimension_numbers<[1], [0], [0], [1], [0, 0, 1, 1], [], []>} : vector<8x64xf32>, vector<64x4xf32>, vector<8x4xf32> -> vector<8x4xf32>
    %c168 = arith.constant 168 : index
    %c0_46 = arith.constant 0 : index
    %112 = vector.load %arg0[%c168, %c0_46] : memref<360x128xf32, #tpu.memory_space<vmem>>, vector<8x4xf32>
    %113 = arith.addf %111, %112 : vector<8x4xf32>
    %114 = arith.addf %103, %113 : vector<8x4xf32>
    %c176 = arith.constant 176 : index
    %c0_47 = arith.constant 0 : index
    %115 = vector.load %arg0[%c176, %c0_47] : memref<360x128xf32, #tpu.memory_space<vmem>>, vector<8x4xf32>
    %c184 = arith.constant 184 : index
    %c0_48 = arith.constant 0 : index
    %116 = vector.load %arg0[%c184, %c0_48] : memref<360x128xf32, #tpu.memory_space<vmem>>, vector<8x4xf32>
    %cst_49 = arith.constant dense<0.000000e+00> : vector<8xf32>
    %117 = vector.multi_reduction <add>, %114, %cst_49 [1] : vector<8x4xf32> to vector<8xf32>
    %118 = vector.shape_cast %117 : vector<8xf32> to vector<8x1xf32>
    %cst_50 = arith.constant 4.000000e+00 : f32
    %119 = vector.broadcast %cst_50 : f32 to vector<8x1xf32>
    %120 = arith.divf %118, %119 : vector<8x1xf32>
    %121 = vector.broadcast %120 : vector<8x1xf32> to vector<8x4xf32>
    %122 = arith.subf %114, %121 : vector<8x4xf32>
    %123 = arith.mulf %122, %122 : vector<8x4xf32>
    %cst_51 = arith.constant dense<0.000000e+00> : vector<8xf32>
    %124 = vector.multi_reduction <add>, %123, %cst_51 [1] : vector<8x4xf32> to vector<8xf32>
    %125 = vector.shape_cast %124 : vector<8xf32> to vector<8x1xf32>
    %cst_52 = arith.constant 4.000000e+00 : f32
    %126 = vector.broadcast %cst_52 : f32 to vector<8x1xf32>
    %127 = arith.divf %125, %126 : vector<8x1xf32>
    %128 = vector.broadcast %120 : vector<8x1xf32> to vector<8x4xf32>
    %129 = arith.subf %114, %128 : vector<8x4xf32>
    %cst_53 = arith.constant 9.99999974E-6 : f32
    %130 = vector.broadcast %cst_53 : f32 to vector<8x1xf32>
    %131 = arith.addf %127, %130 : vector<8x1xf32>
    %132 = math.rsqrt %131 : vector<8x1xf32>
    %133 = vector.broadcast %132 : vector<8x1xf32> to vector<8x4xf32>
    %134 = arith.mulf %129, %133 : vector<8x4xf32>
    %135 = arith.mulf %134, %115 : vector<8x4xf32>
    %136 = arith.addf %135, %116 : vector<8x4xf32>
    %c192 = arith.constant 192 : index
    %c0_54 = arith.constant 0 : index
    %137 = vector.load %arg0[%c192, %c0_54] : memref<360x128xf32, #tpu.memory_space<vmem>>, vector<4x12xf32>
    %cst_55 = arith.constant dense<0.000000e+00> : vector<8x12xf32>
    %138 = tpu.matmul %136, %137, %cst_55 {dimension_numbers = #tpu.dot_dimension_numbers<[1], [0], [0], [1], [0, 0, 1, 1], [], []>} : vector<8x4xf32>, vector<4x12xf32>, vector<8x12xf32> -> vector<8x12xf32>
    %c200 = arith.constant 200 : index
    %c0_56 = arith.constant 0 : index
    %139 = vector.load %arg0[%c200, %c0_56] : memref<360x128xf32, #tpu.memory_space<vmem>>, vector<8x12xf32>
    %140 = arith.addf %138, %139 : vector<8x12xf32>
    %141 = vector.extract_strided_slice %140 {offsets = [0, 0], sizes = [8, 2], strides = [1, 1]} : vector<8x12xf32> to vector<8x2xf32>
    %142 = vector.extract_strided_slice %140 {offsets = [0, 4], sizes = [8, 2], strides = [1, 1]} : vector<8x12xf32> to vector<8x2xf32>
    %143 = vector.extract_strided_slice %140 {offsets = [0, 8], sizes = [8, 2], strides = [1, 1]} : vector<8x12xf32> to vector<8x2xf32>
    %144 = tpu.transpose %142, [1, 0] : vector<8x2xf32> -> vector<2x8xf32>
    %cst_57 = arith.constant dense<0.000000e+00> : vector<8x8xf32>
    %145 = tpu.matmul %141, %144, %cst_57 {dimension_numbers = #tpu.dot_dimension_numbers<[1], [0], [0], [1], [0, 0, 1, 1], [], []>} : vector<8x2xf32>, vector<2x8xf32>, vector<8x8xf32> -> vector<8x8xf32>
    %cst_58 = arith.constant 0.707106769 : f32
    %146 = vector.broadcast %cst_58 : f32 to vector<8x8xf32>
    %147 = arith.mulf %145, %146 : vector<8x8xf32>
    %148 = arith.addf %147, %35 : vector<8x8xf32>
    %cst_59 = arith.constant dense<0xFF800000> : vector<8xf32>
    %149 = vector.multi_reduction <maximumf>, %148, %cst_59 [1] : vector<8x8xf32> to vector<8xf32>
    %150 = vector.shape_cast %149 : vector<8xf32> to vector<8x1xf32>
    %151 = vector.broadcast %150 : vector<8x1xf32> to vector<8x8xf32>
    %152 = arith.subf %148, %151 : vector<8x8xf32>
    %153 = math.exp %152 : vector<8x8xf32>
    %cst_60 = arith.constant dense<0.000000e+00> : vector<8xf32>
    %154 = vector.multi_reduction <add>, %153, %cst_60 [1] : vector<8x8xf32> to vector<8xf32>
    %155 = vector.shape_cast %154 : vector<8xf32> to vector<8x1xf32>
    %156 = vector.broadcast %155 : vector<8x1xf32> to vector<8x8xf32>
    %157 = arith.divf %153, %156 : vector<8x8xf32>
    %cst_61 = arith.constant dense<0.000000e+00> : vector<8x2xf32>
    %158 = tpu.matmul %157, %143, %cst_61 {dimension_numbers = #tpu.dot_dimension_numbers<[1], [0], [0], [1], [0, 0, 1, 1], [], []>} : vector<8x8xf32>, vector<8x2xf32>, vector<8x2xf32> -> vector<8x2xf32>
    %159 = vector.extract_strided_slice %140 {offsets = [0, 2], sizes = [8, 2], strides = [1, 1]} : vector<8x12xf32> to vector<8x2xf32>
    %160 = vector.extract_strided_slice %140 {offsets = [0, 6], sizes = [8, 2], strides = [1, 1]} : vector<8x12xf32> to vector<8x2xf32>
    %161 = vector.extract_strided_slice %140 {offsets = [0, 10], sizes = [8, 2], strides = [1, 1]} : vector<8x12xf32> to vector<8x2xf32>
    %162 = tpu.transpose %160, [1, 0] : vector<8x2xf32> -> vector<2x8xf32>
    %cst_62 = arith.constant dense<0.000000e+00> : vector<8x8xf32>
    %163 = tpu.matmul %159, %162, %cst_62 {dimension_numbers = #tpu.dot_dimension_numbers<[1], [0], [0], [1], [0, 0, 1, 1], [], []>} : vector<8x2xf32>, vector<2x8xf32>, vector<8x8xf32> -> vector<8x8xf32>
    %cst_63 = arith.constant 0.707106769 : f32
    %164 = vector.broadcast %cst_63 : f32 to vector<8x8xf32>
    %165 = arith.mulf %163, %164 : vector<8x8xf32>
    %166 = arith.addf %165, %35 : vector<8x8xf32>
    %cst_64 = arith.constant dense<0xFF800000> : vector<8xf32>
    %167 = vector.multi_reduction <maximumf>, %166, %cst_64 [1] : vector<8x8xf32> to vector<8xf32>
    %168 = vector.shape_cast %167 : vector<8xf32> to vector<8x1xf32>
    %169 = vector.broadcast %168 : vector<8x1xf32> to vector<8x8xf32>
    %170 = arith.subf %166, %169 : vector<8x8xf32>
    %171 = math.exp %170 : vector<8x8xf32>
    %cst_65 = arith.constant dense<0.000000e+00> : vector<8xf32>
    %172 = vector.multi_reduction <add>, %171, %cst_65 [1] : vector<8x8xf32> to vector<8xf32>
    %173 = vector.shape_cast %172 : vector<8xf32> to vector<8x1xf32>
    %174 = vector.broadcast %173 : vector<8x1xf32> to vector<8x8xf32>
    %175 = arith.divf %171, %174 : vector<8x8xf32>
    %cst_66 = arith.constant dense<0.000000e+00> : vector<8x2xf32>
    %176 = tpu.matmul %175, %161, %cst_66 {dimension_numbers = #tpu.dot_dimension_numbers<[1], [0], [0], [1], [0, 0, 1, 1], [], []>} : vector<8x8xf32>, vector<8x2xf32>, vector<8x2xf32> -> vector<8x2xf32>
    %177 = tpu.concatenate %158, %176 in 1 : vector<8x2xf32>, vector<8x2xf32> -> vector<8x4xf32>
    %c208 = arith.constant 208 : index
    %c0_67 = arith.constant 0 : index
    %178 = vector.load %arg0[%c208, %c0_67] : memref<360x128xf32, #tpu.memory_space<vmem>>, vector<4x4xf32>
    %cst_68 = arith.constant dense<0.000000e+00> : vector<8x4xf32>
    %179 = tpu.matmul %177, %178, %cst_68 {dimension_numbers = #tpu.dot_dimension_numbers<[1], [0], [0], [1], [0, 0, 1, 1], [], []>} : vector<8x4xf32>, vector<4x4xf32>, vector<8x4xf32> -> vector<8x4xf32>
    %c216 = arith.constant 216 : index
    %c0_69 = arith.constant 0 : index
    %180 = vector.load %arg0[%c216, %c0_69] : memref<360x128xf32, #tpu.memory_space<vmem>>, vector<8x4xf32>
    %181 = arith.addf %179, %180 : vector<8x4xf32>
    %182 = arith.addf %136, %181 : vector<8x4xf32>
    %c224 = arith.constant 224 : index
    %c0_70 = arith.constant 0 : index
    %183 = vector.load %arg0[%c224, %c0_70] : memref<360x128xf32, #tpu.memory_space<vmem>>, vector<8x4xf32>
    %c232 = arith.constant 232 : index
    %c0_71 = arith.constant 0 : index
    %184 = vector.load %arg0[%c232, %c0_71] : memref<360x128xf32, #tpu.memory_space<vmem>>, vector<8x4xf32>
    %cst_72 = arith.constant dense<0.000000e+00> : vector<8xf32>
    %185 = vector.multi_reduction <add>, %182, %cst_72 [1] : vector<8x4xf32> to vector<8xf32>
    %186 = vector.shape_cast %185 : vector<8xf32> to vector<8x1xf32>
    %cst_73 = arith.constant 4.000000e+00 : f32
    %187 = vector.broadcast %cst_73 : f32 to vector<8x1xf32>
    %188 = arith.divf %186, %187 : vector<8x1xf32>
    %189 = vector.broadcast %188 : vector<8x1xf32> to vector<8x4xf32>
    %190 = arith.subf %182, %189 : vector<8x4xf32>
    %191 = arith.mulf %190, %190 : vector<8x4xf32>
    %cst_74 = arith.constant dense<0.000000e+00> : vector<8xf32>
    %192 = vector.multi_reduction <add>, %191, %cst_74 [1] : vector<8x4xf32> to vector<8xf32>
    %193 = vector.shape_cast %192 : vector<8xf32> to vector<8x1xf32>
    %cst_75 = arith.constant 4.000000e+00 : f32
    %194 = vector.broadcast %cst_75 : f32 to vector<8x1xf32>
    %195 = arith.divf %193, %194 : vector<8x1xf32>
    %196 = vector.broadcast %188 : vector<8x1xf32> to vector<8x4xf32>
    %197 = arith.subf %182, %196 : vector<8x4xf32>
    %cst_76 = arith.constant 9.99999974E-6 : f32
    %198 = vector.broadcast %cst_76 : f32 to vector<8x1xf32>
    %199 = arith.addf %195, %198 : vector<8x1xf32>
    %200 = math.rsqrt %199 : vector<8x1xf32>
    %201 = vector.broadcast %200 : vector<8x1xf32> to vector<8x4xf32>
    %202 = arith.mulf %197, %201 : vector<8x4xf32>
    %203 = arith.mulf %202, %183 : vector<8x4xf32>
    %204 = arith.addf %203, %184 : vector<8x4xf32>
    %c240 = arith.constant 240 : index
    %c0_77 = arith.constant 0 : index
    %205 = vector.load %arg0[%c240, %c0_77] : memref<360x128xf32, #tpu.memory_space<vmem>>, vector<4x64xf32>
    %cst_78 = arith.constant dense<0.000000e+00> : vector<8x64xf32>
    %206 = tpu.matmul %204, %205, %cst_78 {dimension_numbers = #tpu.dot_dimension_numbers<[1], [0], [0], [1], [0, 0, 1, 1], [], []>} : vector<8x4xf32>, vector<4x64xf32>, vector<8x64xf32> -> vector<8x64xf32>
    %c248 = arith.constant 248 : index
    %c0_79 = arith.constant 0 : index
    %207 = vector.load %arg0[%c248, %c0_79] : memref<360x128xf32, #tpu.memory_space<vmem>>, vector<8x64xf32>
    %208 = arith.addf %206, %207 : vector<8x64xf32>
    %cst_80 = arith.constant 0.000000e+00 : f32
    %209 = vector.broadcast %cst_80 : f32 to vector<8x64xf32>
    %210 = arith.maximumf %208, %209 : vector<8x64xf32>
    %c256 = arith.constant 256 : index
    %c0_81 = arith.constant 0 : index
    %211 = vector.load %arg0[%c256, %c0_81] : memref<360x128xf32, #tpu.memory_space<vmem>>, vector<64x4xf32>
    %cst_82 = arith.constant dense<0.000000e+00> : vector<8x4xf32>
    %212 = tpu.matmul %210, %211, %cst_82 {dimension_numbers = #tpu.dot_dimension_numbers<[1], [0], [0], [1], [0, 0, 1, 1], [], []>} : vector<8x64xf32>, vector<64x4xf32>, vector<8x4xf32> -> vector<8x4xf32>
    %c320 = arith.constant 320 : index
    %c0_83 = arith.constant 0 : index
    %213 = vector.load %arg0[%c320, %c0_83] : memref<360x128xf32, #tpu.memory_space<vmem>>, vector<8x4xf32>
    %214 = arith.addf %212, %213 : vector<8x4xf32>
    %215 = arith.addf %204, %214 : vector<8x4xf32>
    %c328 = arith.constant 328 : index
    %c0_84 = arith.constant 0 : index
    %216 = vector.load %arg0[%c328, %c0_84] : memref<360x128xf32, #tpu.memory_space<vmem>>, vector<8x4xf32>
    %c336 = arith.constant 336 : index
    %c0_85 = arith.constant 0 : index
    %217 = vector.load %arg0[%c336, %c0_85] : memref<360x128xf32, #tpu.memory_space<vmem>>, vector<8x4xf32>
    %cst_86 = arith.constant dense<0.000000e+00> : vector<8xf32>
    %218 = vector.multi_reduction <add>, %215, %cst_86 [1] : vector<8x4xf32> to vector<8xf32>
    %219 = vector.shape_cast %218 : vector<8xf32> to vector<8x1xf32>
    %cst_87 = arith.constant 4.000000e+00 : f32
    %220 = vector.broadcast %cst_87 : f32 to vector<8x1xf32>
    %221 = arith.divf %219, %220 : vector<8x1xf32>
    %222 = vector.broadcast %221 : vector<8x1xf32> to vector<8x4xf32>
    %223 = arith.subf %215, %222 : vector<8x4xf32>
    %224 = arith.mulf %223, %223 : vector<8x4xf32>
    %cst_88 = arith.constant dense<0.000000e+00> : vector<8xf32>
    %225 = vector.multi_reduction <add>, %224, %cst_88 [1] : vector<8x4xf32> to vector<8xf32>
    %226 = vector.shape_cast %225 : vector<8xf32> to vector<8x1xf32>
    %cst_89 = arith.constant 4.000000e+00 : f32
    %227 = vector.broadcast %cst_89 : f32 to vector<8x1xf32>
    %228 = arith.divf %226, %227 : vector<8x1xf32>
    %229 = vector.broadcast %221 : vector<8x1xf32> to vector<8x4xf32>
    %230 = arith.subf %215, %229 : vector<8x4xf32>
    %cst_90 = arith.constant 9.99999974E-6 : f32
    %231 = vector.broadcast %cst_90 : f32 to vector<8x1xf32>
    %232 = arith.addf %228, %231 : vector<8x1xf32>
    %233 = math.rsqrt %232 : vector<8x1xf32>
    %234 = vector.broadcast %233 : vector<8x1xf32> to vector<8x4xf32>
    %235 = arith.mulf %230, %234 : vector<8x4xf32>
    %236 = arith.mulf %235, %216 : vector<8x4xf32>
    %237 = arith.addf %236, %217 : vector<8x4xf32>
    %c344 = arith.constant 344 : index
    %c0_91 = arith.constant 0 : index
    %238 = vector.load %arg0[%c344, %c0_91] : memref<360x128xf32, #tpu.memory_space<vmem>>, vector<4x128xf32>
    %cst_92 = arith.constant dense<0.000000e+00> : vector<8x128xf32>
    %239 = tpu.matmul %237, %238, %cst_92 {dimension_numbers = #tpu.dot_dimension_numbers<[1], [0], [0], [1], [0, 0, 1, 1], [], []>} : vector<8x4xf32>, vector<4x128xf32>, vector<8x128xf32> -> vector<8x128xf32>
    %c352 = arith.constant 352 : index
    %c0_93 = arith.constant 0 : index
    %240 = vector.load %arg0[%c352, %c0_93] : memref<360x128xf32, #tpu.memory_space<vmem>>, vector<8x128xf32>
    %241 = arith.addf %239, %240 : vector<8x128xf32>
    %c0_94 = arith.constant 0 : index
    %c0_95 = arith.constant 0 : index
    %242 = vector.load %arg3[%c0_94, %c0_95] : memref<8x128xf32, #tpu.memory_space<vmem>>, vector<8x128xf32>
    tpu.vector_store %arg3[%c0_94, %c0_95], %241 {strides = array<i32>} : memref<8x128xf32, #tpu.memory_space<vmem>>, vector<8x128xf32>,
    return
  }
}

</mosaic_0001>

<llo_original>
// kernel: forward.1
$region0: #{forward.1}
  #allocation0 [shape = 'u32[]', space=smem, size = 0x4, offset = 0x4, fixed_abs, tag = 'smem constant byte address 0x4 - core index']
  #allocation1 [shape = 'u32[144,128]{1,0:T(1,128)}', space=vmem, size = 0x12000, scoped, tag = 'internal scratch']
  %s0 = inlined_call_operand.hbm [shape: f32[360,128], index: 0, kind: input, shape index: {}]
  %s1 = inlined_call_operand.vmem [shape: f32[80,4], index: 1, kind: input, shape index: {}]
  %s2 = inlined_call_operand.vmem [shape: f32[1,8], index: 2, kind: input, shape index: {}]
  %s3 = inlined_call_operand.vmem [shape: f32[8,128], index: 3, kind: output, shape index: {}]
  %s4 = sld [smem:[#allocation0]]
  $region26: #{forward.1} parent=0
    _
  %s6 = ssub.s32 1, %s4
  %s7 = scalar_select 0, %s6, %s4
  $region1: #{forward.1} parent=0
    #allocation2 [shape = 'u8[184320]{0}', space=vmem, size = 0x2d000, scoped, tag = 'input window, operand 0, single buffered']
    #allocation3 [shape = 's32[1]{0}', space=sflag, size = 0x4, scoped, tag = 'scoped memory for forward.1']
    %8 = vsyncpa [#allocation3], 0
    // Predicated region
    $region2: #{forward.1} parent=1 // pred_check
      _
    $region3: #{forward.1} parent=1 // pred_check_branch
      %10 = sbr.rel (0) target = $region5
    $region4: #{forward.1} parent=1 // pred_region
      %s12 = ssub.s32 5760, 5760
      %13 = vsyncadd [#allocation3], %s12
      %s14 = sshll.u32 [#allocation2], 4
      %s15 = int_to_ptr.vmem [resolvable:$true] %s14
      %20 = dma.hbm_to_vmem [thread:$0]  %s0, 5760, %s15, [#allocation3], 128, 128, 8
    $region5: #{forward.1} parent=1 // pred_fallthru
      _
    // Predicated region
    $region6: #{forward.1} parent=1 // pred_check
      _
    $region7: #{forward.1} parent=1 // pred_check_branch
      %22 = sbr.rel (0) target = $region9
    $region8: #{forward.1} parent=1 // pred_region
      _
    $region9: #{forward.1} parent=1 // pred_fallthru
      _
    // Predicated region
    $region10: #{forward.1} parent=1 // pred_check
      _
    $region11: #{forward.1} parent=1 // pred_check_branch
      %24 = sbr.rel (0) target = $region13
    $region12: #{forward.1} parent=1 // pred_region
      _
    $region13: #{forward.1} parent=1 // pred_fallthru
      _
    // Predicated region
    $region14: #{forward.1} parent=1 // pred_check
      _
    $region15: #{forward.1} parent=1 // pred_check_branch
      %26 = sbr.rel (0) target = $region17
    $region16: #{forward.1} parent=1 // pred_region
      %27 = dma.done [#allocation3], 5760
    $region17: #{forward.1} parent=1 // pred_fallthru
      _
    %v28 = vld [vmem:[#allocation2] sm:$0xff]
    %v29 = vld [vmem:[%s1] sm:$0xff]
    %v30 = vld [vmem:[%s1 + $0x8] sm:$0xff]
    %v31 = vld [vmem:[%s1 + $0x10] sm:$0xff]
    %v32 = vld [vmem:[%s1 + $0x18] sm:$0xff]
    %v33 = vld [vmem:[%s1 + $0x20] sm:$0xff]
    %v34 = vld [vmem:[%s1 + $0x28] sm:$0xff]
    %v35 = vld [vmem:[%s1 + $0x30] sm:$0xff]
    %v36 = vld [vmem:[%s1 + $0x38] sm:$0xff]
    %v37 = vld [vmem:[%s1 + $0x40] sm:$0xff]
    %v38 = vld [vmem:[%s1 + $0x48] sm:$0xff]
    %v39 = vld [vmem:[#allocation2 + $0x8] sm:$0xff]
    %vm40 = vcmask 654336
    %v42 = vsel %vm40, %v28, 0
    %44 = vmatprep.subr.mxu0 0.0
    %45 = vmatpush1.msra.mxu0 %v29
    %46 = vmatprep.subr.mxu0 0.0
    %47 = vmatpush1.msra.mxu0 %v30
    %48 = vmatprep.subr.mxu0 0.0
    %49 = vmatpush1.msra.mxu0 %v31
    %50 = vmatprep.subr.mxu0 0.0
    %51 = vmatpush1.msra.mxu0 %v32
    %52 = vmatprep.subr.mxu0 0.0
    %53 = vmatpush1.msra.mxu0 %v33
    %54 = vmatprep.subr.mxu0 0.0
    %55 = vmatpush1.msra.mxu0 %v34
    %56 = vmatprep.subr.mxu0 0.0
    %57 = vmatpush1.msra.mxu0 %v35
    %58 = vmatprep.subr.mxu0 0.0
    %59 = vmatpush1.msra.mxu0 %v36
    %60 = vmatprep.subr.mxu0 0.0
    %61 = vmatpush1.msra.mxu0 %v37
    %62 = vmatprep.subr.mxu0 0.0
    %63 = vmatpush1.msra.mxu0 %v38
    %64 = vmatprep.subr.mxu0 0.0
    %65 = vmatpush1.msra.mxu0 0.0
    %66 = vmatprep.subr.mxu0 0.0
    %67 = vmatpush1.msra.mxu0 0.0
    %68 = vmatprep.subr.mxu0 0.0
    %69 = vmatpush1.msra.mxu0 0.0
    %70 = vmatprep.subr.mxu0 0.0
    %71 = vmatpush1.msra.mxu0 0.0
    %72 = vmatprep.subr.mxu0 0.0
    %73 = vmatpush1.msra.mxu0 0.0
    %74 = vmatprep.subr.mxu0 0.0
    %75 = vmatpush1.msra.mxu0 0.0
    %76 = vmatprep.subr.mxu0 0.0
    %77 = vmatpush1.msra.mxu0 0.0
    %78 = vmatprep.subr.mxu0 0.0
    %79 = vmatpush1.msra.mxu0 0.0
    %80 = vmatprep.subr.mxu0 0.0
    %81 = vmatpush1.msra.mxu0 0.0
    %82 = vmatprep.subr.mxu0 0.0
    %83 = vmatpush1.msra.mxu0 0.0
    %84 = vmatprep.subr.mxu0 0.0
    %85 = vmatpush1.msra.mxu0 0.0
    %86 = vmatprep.subr.mxu0 0.0
    %87 = vmatpush1.msra.mxu0 0.0
    %88 = vmatprep.subr.mxu0 0.0
    %89 = vmatpush1.msra.mxu0 0.0
    %90 = vmatprep.subr.mxu0 0.0
    %91 = vmatpush1.msra.mxu0 0.0
    %92 = vmatprep.subr.mxu0 0.0
    %93 = vmatpush1.msra.mxu0 0.0
    %94 = vmatprep.subr.mxu0 0.0
    %95 = vmatpush1.msra.mxu0 0.0
    %96 = vmatprep.subr.mxu0 0.0
    %97 = vmatpush1.msra.mxu0 0.0
    %98 = vmatprep.subr.mxu0 0.0
    %99 = vmatpush1.msra.mxu0 0.0
    %100 = vmatprep.subr.mxu0 0.0
    %101 = vmatpush1.msra.mxu0 0.0
    %102 = vmatprep.subr.mxu0 0.0
    %103 = vmatpush1.msra.mxu0 0.0
    %104 = vmatprep.subr.mxu0 0.0
    %105 = vmatpush1.msra.mxu0 0.0
    %106 = vmatprep.subr.mxu0 0.0
    %107 = vmatpush1.msra.mxu0 0.0
    %108 = vmatprep.mubr.f32.mxu0 0.0
    %109 = vmatmul.mubr.f32.gmra.mrb[0].mxu0 %v42
    %v110 = vpop.f32.mrb[0].mxu0
    %v111 = vadd.f32 %v39, %v110
    %v112 = vpop.f32.mrb[0].mxu0
    %113 = vdwg.mxu0
    %v114 = vld [vmem:[#allocation2 + $0x10] sm:$0xff]
    %v115 = vld [vmem:[#allocation2 + $0x18] sm:$0xff]
    %vm116 = vcmask 31744
    %v117 = vsel %vm116, %v111, 0.0
    %118 = vadd.xlane.f32.xlu0 %v117
    %v119 = vpop.xlane.xlu0 %118
    %v120 = vrcp.pop 4.0
    %v121 = vmul.f32 %v119, %v120
    %v122 = vsub.f32 %v111, %v121
    %v123 = vmul.f32 %v122, %v122
    %v124 = vsel %vm116, %v123, 0.0
    %125 = vadd.xlane.f32.xlu0 %v124
    %v126 = vpop.xlane.xlu0 %125
    %v127 = vmul.f32 %v126, %v120
    %v128 = vadd.f32 %v127, 1e-05
    %v129 = vrsqrt.pop %v128
    %v130 = vmul.f32 %v122, %v129
    %v131 = vmul.f32 %v130, %v114
    %v132 = vadd.f32 %v131, %v115
    %v133 = vld [vmem:[#allocation2 + $0x20] sm:$0xff]
    %v134 = vld [vmem:[%s2] sm:$0x1]
    %vm135 = vcmp.gt.f32.partialorder %v134, 0.5
    %v136 = vsel %vm135, 0.0, -1e+09
    %v138 = vlaneseq
    %v139 = vshrl.u32 %v138, 7
    %v140 = vsub.s32 0, %v139
    %v141 = vrot.slane %v136, %v140
    %v143 = vadd.f32 %v133, %v141
    %v144 = vld [vmem:[#allocation2 + $0x28] sm:$0xf]
    %v145 = vld [vmem:[#allocation2 + $0x30] sm:$0xff]
    %v147 = vsel %vm116, %v132, 0
    %vm149 = vcmask 1043456
    %v151 = vsel %vm149, %v144, 0
    %153 = vmatprep.subr.mxu0 0.0
    %154 = vmatpush1.msra.mxu0 %v151
    %155 = vmatprep.subr.mxu0 0.0
    %156 = vmatpush1.msra.mxu0 0.0
    %157 = vmatprep.subr.mxu0 0.0
    %158 = vmatpush1.msra.mxu0 0.0
    %159 = vmatprep.subr.mxu0 0.0
    %160 = vmatpush1.msra.mxu0 0.0
    %161 = vmatprep.subr.mxu0 0.0
    %162 = vmatpush1.msra.mxu0 0.0
    %163 = vmatprep.subr.mxu0 0.0
    %164 = vmatpush1.msra.mxu0 0.0
    %165 = vmatprep.subr.mxu0 0.0
    %166 = vmatpush1.msra.mxu0 0.0
    %167 = vmatprep.subr.mxu0 0.0
    %168 = vmatpush1.msra.mxu0 0.0
    %169 = vmatprep.subr.mxu0 0.0
    %170 = vmatpush1.msra.mxu0 0.0
    %171 = vmatprep.subr.mxu0 0.0
    %172 = vmatpush1.msra.mxu0 0.0
    %173 = vmatprep.subr.mxu0 0.0
    %174 = vmatpush1.msra.mxu0 0.0
    %175 = vmatprep.subr.mxu0 0.0
    %176 = vmatpush1.msra.mxu0 0.0
    %177 = vmatprep.subr.mxu0 0.0
    %178 = vmatpush1.msra.mxu0 0.0
    %179 = vmatprep.subr.mxu0 0.0
    %180 = vmatpush1.msra.mxu0 0.0
    %181 = vmatprep.subr.mxu0 0.0
    %182 = vmatpush1.msra.mxu0 0.0
    %183 = vmatprep.subr.mxu0 0.0
    %184 = vmatpush1.msra.mxu0 0.0
    %185 = vmatprep.subr.mxu0 0.0
    %186 = vmatpush1.msra.mxu0 0.0
    %187 = vmatprep.subr.mxu0 0.0
    %188 = vmatpush1.msra.mxu0 0.0
    %189 = vmatprep.subr.mxu0 0.0
    %190 = vmatpush1.msra.mxu0 0.0
    %191 = vmatprep.subr.mxu0 0.0
    %192 = vmatpush1.msra.mxu0 0.0
    %193 = vmatprep.subr.mxu0 0.0
    %194 = vmatpush1.msra.mxu0 0.0
    %195 = vmatprep.subr.mxu0 0.0
    %196 = vmatpush1.msra.mxu0 0.0
    %197 = vmatprep.subr.mxu0 0.0
    %198 = vmatpush1.msra.mxu0 0.0
    %199 = vmatprep.subr.mxu0 0.0
    %200 = vmatpush1.msra.mxu0 0.0
    %201 = vmatprep.subr.mxu0 0.0
    %202 = vmatpush1.msra.mxu0 0.0
    %203 = vmatprep.subr.mxu0 0.0
    %204 = vmatpush1.msra.mxu0 0.0
    %205 = vmatprep.subr.mxu0 0.0
    %206 = vmatpush1.msra.mxu0 0.0
    %207 = vmatprep.subr.mxu0 0.0
    %208 = vmatpush1.msra.mxu0 0.0
    %209 = vmatprep.subr.mxu0 0.0
    %210 = vmatpush1.msra.mxu0 0.0
    %211 = vmatprep.subr.mxu0 0.0
    %212 = vmatpush1.msra.mxu0 0.0
    %213 = vmatprep.subr.mxu0 0.0
    %214 = vmatpush1.msra.mxu0 0.0
    %215 = vmatprep.subr.mxu0 0.0
    %216 = vmatpush1.msra.mxu0 0.0
    %217 = vmatprep.mubr.f32.mxu0 0.0
    %218 = vmatmul.mubr.f32.gmra.mrb[0].mxu0 %v147
    %v219 = vpop.f32.mrb[0].mxu0
    %v220 = vadd.f32 %v145, %v219
    %v221 = vpop.f32.mrb[0].mxu0
    %222 = vdwg.mxu0
    %224 = vrot.lane.b32.xlu0 %v220, 124
    %v225 = vpop.permute.xlu0 %224
    %vm226 = vcmask 15360
    %v227 = vsel %vm226, %v220, 0
    %v229 = vsel %vm226, %v225, 0
    %231 = vmatprep.subr.mxu0 0.0
    %232 = vmatpush1.xpose.msra.mxu0 %v229
    %233 = vmatprep.subr.mxu0 0.0
    %234 = vmatpush1.xpose.msra.mxu0 0.0
    %235 = vmatprep.subr.mxu0 0.0
    %236 = vmatpush1.xpose.msra.mxu0 0.0
    %237 = vmatprep.subr.mxu0 0.0
    %238 = vmatpush1.xpose.msra.mxu0 0.0
    %239 = vmatprep.subr.mxu0 0.0
    %240 = vmatpush1.xpose.msra.mxu0 0.0
    %241 = vmatprep.subr.mxu0 0.0
    %242 = vmatpush1.xpose.msra.mxu0 0.0
    %243 = vmatprep.subr.mxu0 0.0
    %244 = vmatpush1.xpose.msra.mxu0 0.0
    %245 = vmatprep.subr.mxu0 0.0
    %246 = vmatpush1.xpose.msra.mxu0 0.0
    %247 = vmatprep.subr.mxu0 0.0
    %248 = vmatpush1.xpose.msra.mxu0 0.0
    %249 = vmatprep.subr.mxu0 0.0
    %250 = vmatpush1.xpose.msra.mxu0 0.0
    %251 = vmatprep.subr.mxu0 0.0
    %252 = vmatpush1.xpose.msra.mxu0 0.0
    %253 = vmatprep.subr.mxu0 0.0
    %254 = vmatpush1.xpose.msra.mxu0 0.0
    %255 = vmatprep.subr.mxu0 0.0
    %256 = vmatpush1.xpose.msra.mxu0 0.0
    %257 = vmatprep.subr.mxu0 0.0
    %258 = vmatpush1.xpose.msra.mxu0 0.0
    %259 = vmatprep.subr.mxu0 0.0
    %260 = vmatpush1.xpose.msra.mxu0 0.0
    %261 = vmatprep.subr.mxu0 0.0
    %262 = vmatpush1.xpose.msra.mxu0 0.0
    %263 = vmatprep.subr.mxu0 0.0
    %264 = vmatpush1.xpose.msra.mxu0 0.0
    %265 = vmatprep.subr.mxu0 0.0
    %266 = vmatpush1.xpose.msra.mxu0 0.0
    %267 = vmatprep.subr.mxu0 0.0
    %268 = vmatpush1.xpose.msra.mxu0 0.0
    %269 = vmatprep.subr.mxu0 0.0
    %270 = vmatpush1.xpose.msra.mxu0 0.0
    %271 = vmatprep.subr.mxu0 0.0
    %272 = vmatpush1.xpose.msra.mxu0 0.0
    %273 = vmatprep.subr.mxu0 0.0
    %274 = vmatpush1.xpose.msra.mxu0 0.0
    %275 = vmatprep.subr.mxu0 0.0
    %276 = vmatpush1.xpose.msra.mxu0 0.0
    %277 = vmatprep.subr.mxu0 0.0
    %278 = vmatpush1.xpose.msra.mxu0 0.0
    %279 = vmatprep.subr.mxu0 0.0
    %280 = vmatpush1.xpose.msra.mxu0 0.0
    %281 = vmatprep.subr.mxu0 0.0
    %282 = vmatpush1.xpose.msra.mxu0 0.0
    %283 = vmatprep.subr.mxu0 0.0
    %284 = vmatpush1.xpose.msra.mxu0 0.0
    %285 = vmatprep.subr.mxu0 0.0
    %286 = vmatpush1.xpose.msra.mxu0 0.0
    %287 = vmatprep.subr.mxu0 0.0
    %288 = vmatpush1.xpose.msra.mxu0 0.0
    %289 = vmatprep.subr.mxu0 0.0
    %290 = vmatpush1.xpose.msra.mxu0 0.0
    %291 = vmatprep.subr.mxu0 0.0
    %292 = vmatpush1.xpose.msra.mxu0 0.0
    %293 = vmatprep.subr.mxu0 0.0
    %294 = vmatpush1.xpose.msra.mxu0 0.0
    %295 = vmatprep.mubr.f32.mxu0 0.0
    %296 = vmatmul.mubr.f32.gmra.mrb[0].mxu0 %v227
    %v297 = vpop.f32.mrb[0].mxu0
    %v298 = vadd.f32 0.0, %v297
    %v299 = vpop.f32.mrb[0].mxu0
    %300 = vdwg.mxu0
    %v301 = vmul.f32 %v298, 0.70710677
    %v302 = vadd.f32 %v301, %v143
    %vm303 = vcmask 64512
    %v304 = vsel %vm303, %v302, -inf
    %305 = vmax.xlane.f32.xlu0 %v304
    %v306 = vpop.xlane.xlu0 %305
    %v307 = vsub.f32 %v302, %v306
    %v308 = vmul.f32 %v307, 1.442695
    %v309 = vpow.pop %v308
    %v310 = vsel %vm303, %v309, 0.0
    %311 = vadd.xlane.f32.xlu0 %v310
    %v312 = vpop.xlane.xlu0 %311
    %v313 = vrcp.pop %v312
    %v314 = vmul.f32 %v309, %v313
    %315 = vrot.lane.b32.xlu0 %v220, 120
    %v316 = vpop.permute.xlu0 %315
    %v319 = vsel %vm303, %v314, 0
    %321 = vmatprep.subr.mxu0 0.0
    %322 = vmatpush1.msra.mxu0 %v316
    %323 = vmatprep.subr.mxu0 0.0
    %324 = vmatpush1.msra.mxu0 0.0
    %325 = vmatprep.subr.mxu0 0.0
    %326 = vmatpush1.msra.mxu0 0.0
    %327 = vmatprep.subr.mxu0 0.0
    %328 = vmatpush1.msra.mxu0 0.0
    %329 = vmatprep.subr.mxu0 0.0
    %330 = vmatpush1.msra.mxu0 0.0
    %331 = vmatprep.subr.mxu0 0.0
    %332 = vmatpush1.msra.mxu0 0.0
    %333 = vmatprep.subr.mxu0 0.0
    %334 = vmatpush1.msra.mxu0 0.0
    %335 = vmatprep.subr.mxu0 0.0
    %336 = vmatpush1.msra.mxu0 0.0
    %337 = vmatprep.subr.mxu0 0.0
    %338 = vmatpush1.msra.mxu0 0.0
    %339 = vmatprep.subr.mxu0 0.0
    %340 = vmatpush1.msra.mxu0 0.0
    %341 = vmatprep.subr.mxu0 0.0
    %342 = vmatpush1.msra.mxu0 0.0
    %343 = vmatprep.subr.mxu0 0.0
    %344 = vmatpush1.msra.mxu0 0.0
    %345 = vmatprep.subr.mxu0 0.0
    %346 = vmatpush1.msra.mxu0 0.0
    %347 = vmatprep.subr.mxu0 0.0
    %348 = vmatpush1.msra.mxu0 0.0
    %349 = vmatprep.subr.mxu0 0.0
    %350 = vmatpush1.msra.mxu0 0.0
    %351 = vmatprep.subr.mxu0 0.0
    %352 = vmatpush1.msra.mxu0 0.0
    %353 = vmatprep.subr.mxu0 0.0
    %354 = vmatpush1.msra.mxu0 0.0
    %355 = vmatprep.subr.mxu0 0.0
    %356 = vmatpush1.msra.mxu0 0.0
    %357 = vmatprep.subr.mxu0 0.0
    %358 = vmatpush1.msra.mxu0 0.0
    %359 = vmatprep.subr.mxu0 0.0
    %360 = vmatpush1.msra.mxu0 0.0
    %361 = vmatprep.subr.mxu0 0.0
    %362 = vmatpush1.msra.mxu0 0.0
    %363 = vmatprep.subr.mxu0 0.0
    %364 = vmatpush1.msra.mxu0 0.0
    %365 = vmatprep.subr.mxu0 0.0
    %366 = vmatpush1.msra.mxu0 0.0
    %367 = vmatprep.subr.mxu0 0.0
    %368 = vmatpush1.msra.mxu0 0.0
    %369 = vmatprep.subr.mxu0 0.0
    %370 = vmatpush1.msra.mxu0 0.0
    %371 = vmatprep.subr.mxu0 0.0
    %372 = vmatpush1.msra.mxu0 0.0
    %373 = vmatprep.subr.mxu0 0.0
    %374 = vmatpush1.msra.mxu0 0.0
    %375 = vmatprep.subr.mxu0 0.0
    %376 = vmatpush1.msra.mxu0 0.0
    %377 = vmatprep.subr.mxu0 0.0
    %378 = vmatpush1.msra.mxu0 0.0
    %379 = vmatprep.subr.mxu0 0.0
    %380 = vmatpush1.msra.mxu0 0.0
    %381 = vmatprep.subr.mxu0 0.0
    %382 = vmatpush1.msra.mxu0 0.0
    %383 = vmatprep.subr.mxu0 0.0
    %384 = vmatpush1.msra.mxu0 0.0
    %385 = vmatprep.mubr.f32.mxu0 0.0
    %386 = vmatmul.mubr.f32.gmra.mrb[0].mxu0 %v319
    %v387 = vpop.f32.mrb[0].mxu0
    %v388 = vadd.f32 0.0, %v387
    %v389 = vpop.f32.mrb[0].mxu0
    %390 = vdwg.mxu0
    %391 = vrot.lane.b32.xlu0 %v220, 126
    %v392 = vpop.permute.xlu0 %391
    %393 = vrot.lane.b32.xlu0 %v220, 122
    %v394 = vpop.permute.xlu0 %393
    %v395 = vsel %vm226, %v392, 0
    %v397 = vsel %vm226, %v394, 0
    %399 = vmatprep.subr.mxu0 0.0
    %400 = vmatpush1.xpose.msra.mxu0 %v397
    %401 = vmatprep.subr.mxu0 0.0
    %402 = vmatpush1.xpose.msra.mxu0 0.0
    %403 = vmatprep.subr.mxu0 0.0
    %404 = vmatpush1.xpose.msra.mxu0 0.0
    %405 = vmatprep.subr.mxu0 0.0
    %406 = vmatpush1.xpose.msra.mxu0 0.0
    %407 = vmatprep.subr.mxu0 0.0
    %408 = vmatpush1.xpose.msra.mxu0 0.0
    %409 = vmatprep.subr.mxu0 0.0
    %410 = vmatpush1.xpose.msra.mxu0 0.0
    %411 = vmatprep.subr.mxu0 0.0
    %412 = vmatpush1.xpose.msra.mxu0 0.0
    %413 = vmatprep.subr.mxu0 0.0
    %414 = vmatpush1.xpose.msra.mxu0 0.0
    %415 = vmatprep.subr.mxu0 0.0
    %416 = vmatpush1.xpose.msra.mxu0 0.0
    %417 = vmatprep.subr.mxu0 0.0
    %418 = vmatpush1.xpose.msra.mxu0 0.0
    %419 = vmatprep.subr.mxu0 0.0
    %420 = vmatpush1.xpose.msra.mxu0 0.0
    %421 = vmatprep.subr.mxu0 0.0
    %422 = vmatpush1.xpose.msra.mxu0 0.0
    %423 = vmatprep.subr.mxu0 0.0
    %424 = vmatpush1.xpose.msra.mxu0 0.0
    %425 = vmatprep.subr.mxu0 0.0
    %426 = vmatpush1.xpose.msra.mxu0 0.0
    %427 = vmatprep.subr.mxu0 0.0
    %428 = vmatpush1.xpose.msra.mxu0 0.0
    %429 = vmatprep.subr.mxu0 0.0
    %430 = vmatpush1.xpose.msra.mxu0 0.0
    %431 = vmatprep.subr.mxu0 0.0
    %432 = vmatpush1.xpose.msra.mxu0 0.0
    %433 = vmatprep.subr.mxu0 0.0
    %434 = vmatpush1.xpose.msra.mxu0 0.0
    %435 = vmatprep.subr.mxu0 0.0
    %436 = vmatpush1.xpose.msra.mxu0 0.0
    %437 = vmatprep.subr.mxu0 0.0
    %438 = vmatpush1.xpose.msra.mxu0 0.0
    %439 = vmatprep.subr.mxu0 0.0
    %440 = vmatpush1.xpose.msra.mxu0 0.0
    %441 = vmatprep.subr.mxu0 0.0
    %442 = vmatpush1.xpose.msra.mxu0 0.0
    %443 = vmatprep.subr.mxu0 0.0
    %444 = vmatpush1.xpose.msra.mxu0 0.0
    %445 = vmatprep.subr.mxu0 0.0
    %446 = vmatpush1.xpose.msra.mxu0 0.0
    %447 = vmatprep.subr.mxu0 0.0
    %448 = vmatpush1.xpose.msra.mxu0 0.0
    %449 = vmatprep.subr.mxu0 0.0
    %450 = vmatpush1.xpose.msra.mxu0 0.0
    %451 = vmatprep.subr.mxu0 0.0
    %452 = vmatpush1.xpose.msra.mxu0 0.0
    %453 = vmatprep.subr.mxu0 0.0
    %454 = vmatpush1.xpose.msra.mxu0 0.0
    %455 = vmatprep.subr.mxu0 0.0
    %456 = vmatpush1.xpose.msra.mxu0 0.0
    %457 = vmatprep.subr.mxu0 0.0
    %458 = vmatpush1.xpose.msra.mxu0 0.0
    %459 = vmatprep.subr.mxu0 0.0
    %460 = vmatpush1.xpose.msra.mxu0 0.0
    %461 = vmatprep.subr.mxu0 0.0
    %462 = vmatpush1.xpose.msra.mxu0 0.0
    %463 = vmatprep.mubr.f32.mxu0 0.0
    %464 = vmatmul.mubr.f32.gmra.mrb[0].mxu0 %v395
    %v465 = vpop.f32.mrb[0].mxu0
    %v466 = vadd.f32 0.0, %v465
    %v467 = vpop.f32.mrb[0].mxu0
    %468 = vdwg.mxu0
    %v469 = vmul.f32 %v466, 0.70710677
    %v470 = vadd.f32 %v469, %v143
    %v471 = vsel %vm303, %v470, -inf
    %472 = vmax.xlane.f32.xlu0 %v471
    %v473 = vpop.xlane.xlu0 %472
    %v474 = vsub.f32 %v470, %v473
    %v475 = vmul.f32 %v474, 1.442695
    %v476 = vpow.pop %v475
    %v477 = vsel %vm303, %v476, 0.0
    %478 = vadd.xlane.f32.xlu0 %v477
    %v479 = vpop.xlane.xlu0 %478
    %v480 = vrcp.pop %v479
    %v481 = vmul.f32 %v476, %v480
    %482 = vrot.lane.b32.xlu0 %v220, 118
    %v483 = vpop.permute.xlu0 %482
    %v486 = vsel %vm303, %v481, 0
    %488 = vmatprep.subr.mxu0 0.0
    %489 = vmatpush1.msra.mxu0 %v483
    %490 = vmatprep.subr.mxu0 0.0
    %491 = vmatpush1.msra.mxu0 0.0
    %492 = vmatprep.subr.mxu0 0.0
    %493 = vmatpush1.msra.mxu0 0.0
    %494 = vmatprep.subr.mxu0 0.0
    %495 = vmatpush1.msra.mxu0 0.0
    %496 = vmatprep.subr.mxu0 0.0
    %497 = vmatpush1.msra.mxu0 0.0
    %498 = vmatprep.subr.mxu0 0.0
    %499 = vmatpush1.msra.mxu0 0.0
    %500 = vmatprep.subr.mxu0 0.0
    %501 = vmatpush1.msra.mxu0 0.0
    %502 = vmatprep.subr.mxu0 0.0
    %503 = vmatpush1.msra.mxu0 0.0
    %504 = vmatprep.subr.mxu0 0.0
    %505 = vmatpush1.msra.mxu0 0.0
    %506 = vmatprep.subr.mxu0 0.0
    %507 = vmatpush1.msra.mxu0 0.0
    %508 = vmatprep.subr.mxu0 0.0
    %509 = vmatpush1.msra.mxu0 0.0
    %510 = vmatprep.subr.mxu0 0.0
    %511 = vmatpush1.msra.mxu0 0.0
    %512 = vmatprep.subr.mxu0 0.0
    %513 = vmatpush1.msra.mxu0 0.0
    %514 = vmatprep.subr.mxu0 0.0
    %515 = vmatpush1.msra.mxu0 0.0
    %516 = vmatprep.subr.mxu0 0.0
    %517 = vmatpush1.msra.mxu0 0.0
    %518 = vmatprep.subr.mxu0 0.0
    %519 = vmatpush1.msra.mxu0 0.0
    %520 = vmatprep.subr.mxu0 0.0
    %521 = vmatpush1.msra.mxu0 0.0
    %522 = vmatprep.subr.mxu0 0.0
    %523 = vmatpush1.msra.mxu0 0.0
    %524 = vmatprep.subr.mxu0 0.0
    %525 = vmatpush1.msra.mxu0 0.0
    %526 = vmatprep.subr.mxu0 0.0
    %527 = vmatpush1.msra.mxu0 0.0
    %528 = vmatprep.subr.mxu0 0.0
    %529 = vmatpush1.msra.mxu0 0.0
    %530 = vmatprep.subr.mxu0 0.0
    %531 = vmatpush1.msra.mxu0 0.0
    %532 = vmatprep.subr.mxu0 0.0
    %533 = vmatpush1.msra.mxu0 0.0
    %534 = vmatprep.subr.mxu0 0.0
    %535 = vmatpush1.msra.mxu0 0.0
    %536 = vmatprep.subr.mxu0 0.0
    %537 = vmatpush1.msra.mxu0 0.0
    %538 = vmatprep.subr.mxu0 0.0
    %539 = vmatpush1.msra.mxu0 0.0
    %540 = vmatprep.subr.mxu0 0.0
    %541 = vmatpush1.msra.mxu0 0.0
    %542 = vmatprep.subr.mxu0 0.0
    %543 = vmatpush1.msra.mxu0 0.0
    %544 = vmatprep.subr.mxu0 0.0
    %545 = vmatpush1.msra.mxu0 0.0
    %546 = vmatprep.subr.mxu0 0.0
    %547 = vmatpush1.msra.mxu0 0.0
    %548 = vmatprep.subr.mxu0 0.0
    %549 = vmatpush1.msra.mxu0 0.0
    %550 = vmatprep.subr.mxu0 0.0
    %551 = vmatpush1.msra.mxu0 0.0
    %552 = vmatprep.mubr.f32.mxu0 0.0
    %553 = vmatmul.mubr.f32.gmra.mrb[0].mxu0 %v486
    %v554 = vpop.f32.mrb[0].mxu0
    %v555 = vadd.f32 0.0, %v554
    %v556 = vpop.f32.mrb[0].mxu0
    %557 = vdwg.mxu0
    %559 = vrot.lane.b32.xlu0 %v555, 2
    %v560 = vpop.permute.xlu0 %559
    %v562 = vsel %vm226, %v388, %v560
    %v563 = vld [vmem:[#allocation2 + $0x38] sm:$0xf]
    %v564 = vld [vmem:[#allocation2 + $0x40] sm:$0xff]
    %v566 = vsel %vm116, %v562, 0
    %v569 = vsel %vm149, %v563, 0
    %571 = vmatprep.subr.mxu0 0.0
    %572 = vmatpush1.msra.mxu0 %v569
    %573 = vmatprep.subr.mxu0 0.0
    %574 = vmatpush1.msra.mxu0 0.0
    %575 = vmatprep.subr.mxu0 0.0
    %576 = vmatpush1.msra.mxu0 0.0
    %577 = vmatprep.subr.mxu0 0.0
    %578 = vmatpush1.msra.mxu0 0.0
    %579 = vmatprep.subr.mxu0 0.0
    %580 = vmatpush1.msra.mxu0 0.0
    %581 = vmatprep.subr.mxu0 0.0
    %582 = vmatpush1.msra.mxu0 0.0
    %583 = vmatprep.subr.mxu0 0.0
    %584 = vmatpush1.msra.mxu0 0.0
    %585 = vmatprep.subr.mxu0 0.0
    %586 = vmatpush1.msra.mxu0 0.0
    %587 = vmatprep.subr.mxu0 0.0
    %588 = vmatpush1.msra.mxu0 0.0
    %589 = vmatprep.subr.mxu0 0.0
    %590 = vmatpush1.msra.mxu0 0.0
    %591 = vmatprep.subr.mxu0 0.0
    %592 = vmatpush1.msra.mxu0 0.0
    %593 = vmatprep.subr.mxu0 0.0
    %594 = vmatpush1.msra.mxu0 0.0
    %595 = vmatprep.subr.mxu0 0.0
    %596 = vmatpush1.msra.mxu0 0.0
    %597 = vmatprep.subr.mxu0 0.0
    %598 = vmatpush1.msra.mxu0 0.0
    %599 = vmatprep.subr.mxu0 0.0
    %600 = vmatpush1.msra.mxu0 0.0
    %601 = vmatprep.subr.mxu0 0.0
    %602 = vmatpush1.msra.mxu0 0.0
    %603 = vmatprep.subr.mxu0 0.0
    %604 = vmatpush1.msra.mxu0 0.0
    %605 = vmatprep.subr.mxu0 0.0
    %606 = vmatpush1.msra.mxu0 0.0
    %607 = vmatprep.subr.mxu0 0.0
    %608 = vmatpush1.msra.mxu0 0.0
    %609 = vmatprep.subr.mxu0 0.0
    %610 = vmatpush1.msra.mxu0 0.0
    %611 = vmatprep.subr.mxu0 0.0
    %612 = vmatpush1.msra.mxu0 0.0
    %613 = vmatprep.subr.mxu0 0.0
    %614 = vmatpush1.msra.mxu0 0.0
    %615 = vmatprep.subr.mxu0 0.0
    %616 = vmatpush1.msra.mxu0 0.0
    %617 = vmatprep.subr.mxu0 0.0
    %618 = vmatpush1.msra.mxu0 0.0
    %619 = vmatprep.subr.mxu0 0.0
    %620 = vmatpush1.msra.mxu0 0.0
    %621 = vmatprep.subr.mxu0 0.0
    %622 = vmatpush1.msra.mxu0 0.0
    %623 = vmatprep.subr.mxu0 0.0
    %624 = vmatpush1.msra.mxu0 0.0
    %625 = vmatprep.subr.mxu0 0.0
    %626 = vmatpush1.msra.mxu0 0.0
    %627 = vmatprep.subr.mxu0 0.0
    %628 = vmatpush1.msra.mxu0 0.0
    %629 = vmatprep.subr.mxu0 0.0
    %630 = vmatpush1.msra.mxu0 0.0
    %631 = vmatprep.subr.mxu0 0.0
    %632 = vmatpush1.msra.mxu0 0.0
    %633 = vmatprep.subr.mxu0 0.0
    %634 = vmatpush1.msra.mxu0 0.0
    %635 = vmatprep.mubr.f32.mxu0 0.0
    %636 = vmatmul.mubr.f32.gmra.mrb[0].mxu0 %v566
    %v637 = vpop.f32.mrb[0].mxu0
    %v638 = vadd.f32 %v564, %v637
    %v639 = vpop.f32.mrb[0].mxu0
    %640 = vdwg.mxu0
    %v641 = vadd.f32 %v132, %v638
    %v642 = vld [vmem:[#allocation2 + $0x48] sm:$0xff]
    %v643 = vld [vmem:[#allocation2 + $0x50] sm:$0xff]
    %v644 = vsel %vm116, %v641, 0.0
    %645 = vadd.xlane.f32.xlu0 %v644
    %v646 = vpop.xlane.xlu0 %645
    %v647 = vmul.f32 %v646, %v120
    %v648 = vsub.f32 %v641, %v647
    %v649 = vmul.f32 %v648, %v648
    %v650 = vsel %vm116, %v649, 0.0
    %651 = vadd.xlane.f32.xlu0 %v650
    %v652 = vpop.xlane.xlu0 %651
    %v653 = vmul.f32 %v652, %v120
    %v654 = vadd.f32 %v653, 1e-05
    %v655 = vrsqrt.pop %v654
    %v656 = vmul.f32 %v648, %v655
    %v657 = vmul.f32 %v656, %v642
    %v658 = vadd.f32 %v657, %v643
    %v659 = vld [vmem:[#allocation2 + $0x58] sm:$0xf]
    %v660 = vld [vmem:[#allocation2 + $0x60] sm:$0xff]
    %v662 = vsel %vm116, %v658, 0
    %v665 = vsel %vm149, %v659, 0
    %667 = vmatprep.subr.mxu0 0.0
    %668 = vmatpush1.msra.mxu0 %v665
    %669 = vmatprep.subr.mxu0 0.0
    %670 = vmatpush1.msra.mxu0 0.0
    %671 = vmatprep.subr.mxu0 0.0
    %672 = vmatpush1.msra.mxu0 0.0
    %673 = vmatprep.subr.mxu0 0.0
    %674 = vmatpush1.msra.mxu0 0.0
    %675 = vmatprep.subr.mxu0 0.0
    %676 = vmatpush1.msra.mxu0 0.0
    %677 = vmatprep.subr.mxu0 0.0
    %678 = vmatpush1.msra.mxu0 0.0
    %679 = vmatprep.subr.mxu0 0.0
    %680 = vmatpush1.msra.mxu0 0.0
    %681 = vmatprep.subr.mxu0 0.0
    %682 = vmatpush1.msra.mxu0 0.0
    %683 = vmatprep.subr.mxu0 0.0
    %684 = vmatpush1.msra.mxu0 0.0
    %685 = vmatprep.subr.mxu0 0.0
    %686 = vmatpush1.msra.mxu0 0.0
    %687 = vmatprep.subr.mxu0 0.0
    %688 = vmatpush1.msra.mxu0 0.0
    %689 = vmatprep.subr.mxu0 0.0
    %690 = vmatpush1.msra.mxu0 0.0
    %691 = vmatprep.subr.mxu0 0.0
    %692 = vmatpush1.msra.mxu0 0.0
    %693 = vmatprep.subr.mxu0 0.0
    %694 = vmatpush1.msra.mxu0 0.0
    %695 = vmatprep.subr.mxu0 0.0
    %696 = vmatpush1.msra.mxu0 0.0
    %697 = vmatprep.subr.mxu0 0.0
    %698 = vmatpush1.msra.mxu0 0.0
    %699 = vmatprep.subr.mxu0 0.0
    %700 = vmatpush1.msra.mxu0 0.0
    %701 = vmatprep.subr.mxu0 0.0
    %702 = vmatpush1.msra.mxu0 0.0
    %703 = vmatprep.subr.mxu0 0.0
    %704 = vmatpush1.msra.mxu0 0.0
    %705 = vmatprep.subr.mxu0 0.0
    %706 = vmatpush1.msra.mxu0 0.0
    %707 = vmatprep.subr.mxu0 0.0
    %708 = vmatpush1.msra.mxu0 0.0
    %709 = vmatprep.subr.mxu0 0.0
    %710 = vmatpush1.msra.mxu0 0.0
    %711 = vmatprep.subr.mxu0 0.0
    %712 = vmatpush1.msra.mxu0 0.0
    %713 = vmatprep.subr.mxu0 0.0
    %714 = vmatpush1.msra.mxu0 0.0
    %715 = vmatprep.subr.mxu0 0.0
    %716 = vmatpush1.msra.mxu0 0.0
    %717 = vmatprep.subr.mxu0 0.0
    %718 = vmatpush1.msra.mxu0 0.0
    %719 = vmatprep.subr.mxu0 0.0
    %720 = vmatpush1.msra.mxu0 0.0
    %721 = vmatprep.subr.mxu0 0.0
    %722 = vmatpush1.msra.mxu0 0.0
    %723 = vmatprep.subr.mxu0 0.0
    %724 = vmatpush1.msra.mxu0 0.0
    %725 = vmatprep.subr.mxu0 0.0
    %726 = vmatpush1.msra.mxu0 0.0
    %727 = vmatprep.subr.mxu0 0.0
    %728 = vmatpush1.msra.mxu0 0.0
    %729 = vmatprep.subr.mxu0 0.0
    %730 = vmatpush1.msra.mxu0 0.0
    %731 = vmatprep.mubr.f32.mxu0 0.0
    %732 = vmatmul.mubr.f32.gmra.mrb[0].mxu0 %v662
    %v733 = vpop.f32.mrb[0].mxu0
    %v734 = vadd.f32 %v660, %v733
    %v735 = vpop.f32.mrb[0].mxu0
    %736 = vdwg.mxu0
    %v737 = vmax.f32 %v734, 0.0
    %v738 = vld [vmem:[#allocation2 + $0x68] sm:$0xff]
    %v739 = vld [vmem:[#allocation2 + $0x70] sm:$0xff]
    %v740 = vld [vmem:[#allocation2 + $0x78] sm:$0xff]
    %v741 = vld [vmem:[#allocation2 + $0x80] sm:$0xff]
    %v742 = vld [vmem:[#allocation2 + $0x88] sm:$0xff]
    %v743 = vld [vmem:[#allocation2 + $0x90] sm:$0xff]
    %v744 = vld [vmem:[#allocation2 + $0x98] sm:$0xff]
    %v745 = vld [vmem:[#allocation2 + $0xa0] sm:$0xff]
    %v746 = vld [vmem:[#allocation2 + $0xa8] sm:$0xff]
    %vm747 = vcmask 523264
    %v749 = vsel %vm747, %v737, 0
    %751 = vmatprep.subr.mxu0 0.0
    %752 = vmatpush1.msra.mxu0 %v738
    %753 = vmatprep.subr.mxu0 0.0
    %754 = vmatpush1.msra.mxu0 %v739
    %755 = vmatprep.subr.mxu0 0.0
    %756 = vmatpush1.msra.mxu0 %v740
    %757 = vmatprep.subr.mxu0 0.0
    %758 = vmatpush1.msra.mxu0 %v741
    %759 = vmatprep.subr.mxu0 0.0
    %760 = vmatpush1.msra.mxu0 %v742
    %761 = vmatprep.subr.mxu0 0.0
    %762 = vmatpush1.msra.mxu0 %v743
    %763 = vmatprep.subr.mxu0 0.0
    %764 = vmatpush1.msra.mxu0 %v744
    %765 = vmatprep.subr.mxu0 0.0
    %766 = vmatpush1.msra.mxu0 %v745
    %767 = vmatprep.subr.mxu0 0.0
    %768 = vmatpush1.msra.mxu0 0.0
    %769 = vmatprep.subr.mxu0 0.0
    %770 = vmatpush1.msra.mxu0 0.0
    %771 = vmatprep.subr.mxu0 0.0
    %772 = vmatpush1.msra.mxu0 0.0
    %773 = vmatprep.subr.mxu0 0.0
    %774 = vmatpush1.msra.mxu0 0.0
    %775 = vmatprep.subr.mxu0 0.0
    %776 = vmatpush1.msra.mxu0 0.0
    %777 = vmatprep.subr.mxu0 0.0
    %778 = vmatpush1.msra.mxu0 0.0
    %779 = vmatprep.subr.mxu0 0.0
    %780 = vmatpush1.msra.mxu0 0.0
    %781 = vmatprep.subr.mxu0 0.0
    %782 = vmatpush1.msra.mxu0 0.0
    %783 = vmatprep.subr.mxu0 0.0
    %784 = vmatpush1.msra.mxu0 0.0
    %785 = vmatprep.subr.mxu0 0.0
    %786 = vmatpush1.msra.mxu0 0.0
    %787 = vmatprep.subr.mxu0 0.0
    %788 = vmatpush1.msra.mxu0 0.0
    %789 = vmatprep.subr.mxu0 0.0
    %790 = vmatpush1.msra.mxu0 0.0
    %791 = vmatprep.subr.mxu0 0.0
    %792 = vmatpush1.msra.mxu0 0.0
    %793 = vmatprep.subr.mxu0 0.0
    %794 = vmatpush1.msra.mxu0 0.0
    %795 = vmatprep.subr.mxu0 0.0
    %796 = vmatpush1.msra.mxu0 0.0
    %797 = vmatprep.subr.mxu0 0.0
    %798 = vmatpush1.msra.mxu0 0.0
    %799 = vmatprep.subr.mxu0 0.0
    %800 = vmatpush1.msra.mxu0 0.0
    %801 = vmatprep.subr.mxu0 0.0
    %802 = vmatpush1.msra.mxu0 0.0
    %803 = vmatprep.subr.mxu0 0.0
    %804 = vmatpush1.msra.mxu0 0.0
    %805 = vmatprep.subr.mxu0 0.0
    %806 = vmatpush1.msra.mxu0 0.0
    %807 = vmatprep.subr.mxu0 0.0
    %808 = vmatpush1.msra.mxu0 0.0
    %809 = vmatprep.subr.mxu0 0.0
    %810 = vmatpush1.msra.mxu0 0.0
    %811 = vmatprep.subr.mxu0 0.0
    %812 = vmatpush1.msra.mxu0 0.0
    %813 = vmatprep.subr.mxu0 0.0
    %814 = vmatpush1.msra.mxu0 0.0
    %815 = vmatprep.mubr.f32.mxu0 0.0
    %816 = vmatmul.mubr.f32.gmra.mrb[0].mxu0 %v749
    %v817 = vpop.f32.mrb[0].mxu0
    %v818 = vadd.f32 %v746, %v817
    %v819 = vpop.f32.mrb[0].mxu0
    %820 = vdwg.mxu0
    %v821 = vadd.f32 %v658, %v818
    %v822 = vld [vmem:[#allocation2 + $0xb0] sm:$0xff]
    %v823 = vld [vmem:[#allocation2 + $0xb8] sm:$0xff]
    %v824 = vsel %vm116, %v821, 0.0
    %825 = vadd.xlane.f32.xlu0 %v824
    %v826 = vpop.xlane.xlu0 %825
    %v827 = vmul.f32 %v826, %v120
    %v828 = vsub.f32 %v821, %v827
    %v829 = vmul.f32 %v828, %v828
    %v830 = vsel %vm116, %v829, 0.0
    %831 = vadd.xlane.f32.xlu0 %v830
    %v832 = vpop.xlane.xlu0 %831
    %v833 = vmul.f32 %v832, %v120
    %v834 = vadd.f32 %v833, 1e-05
    %v835 = vrsqrt.pop %v834
    %v836 = vmul.f32 %v828, %v835
    %v837 = vmul.f32 %v836, %v822
    %v838 = vadd.f32 %v837, %v823
    %v839 = vld [vmem:[#allocation2 + $0xc0] sm:$0xf]
    %v840 = vld [vmem:[#allocation2 + $0xc8] sm:$0xff]
    %v842 = vsel %vm116, %v838, 0
    %v845 = vsel %vm149, %v839, 0
    %847 = vmatprep.subr.mxu0 0.0
    %848 = vmatpush1.msra.mxu0 %v845
    %849 = vmatprep.subr.mxu0 0.0
    %850 = vmatpush1.msra.mxu0 0.0
    %851 = vmatprep.subr.mxu0 0.0
    %852 = vmatpush1.msra.mxu0 0.0
    %853 = vmatprep.subr.mxu0 0.0
    %854 = vmatpush1.msra.mxu0 0.0
    %855 = vmatprep.subr.mxu0 0.0
    %856 = vmatpush1.msra.mxu0 0.0
    %857 = vmatprep.subr.mxu0 0.0
    %858 = vmatpush1.msra.mxu0 0.0
    %859 = vmatprep.subr.mxu0 0.0
    %860 = vmatpush1.msra.mxu0 0.0
    %861 = vmatprep.subr.mxu0 0.0
    %862 = vmatpush1.msra.mxu0 0.0
    %863 = vmatprep.subr.mxu0 0.0
    %864 = vmatpush1.msra.mxu0 0.0
    %865 = vmatprep.subr.mxu0 0.0
    %866 = vmatpush1.msra.mxu0 0.0
    %867 = vmatprep.subr.mxu0 0.0
    %868 = vmatpush1.msra.mxu0 0.0
    %869 = vmatprep.subr.mxu0 0.0
    %870 = vmatpush1.msra.mxu0 0.0
    %871 = vmatprep.subr.mxu0 0.0
    %872 = vmatpush1.msra.mxu0 0.0
    %873 = vmatprep.subr.mxu0 0.0
    %874 = vmatpush1.msra.mxu0 0.0
    %875 = vmatprep.subr.mxu0 0.0
    %876 = vmatpush1.msra.mxu0 0.0
    %877 = vmatprep.subr.mxu0 0.0
    %878 = vmatpush1.msra.mxu0 0.0
    %879 = vmatprep.subr.mxu0 0.0
    %880 = vmatpush1.msra.mxu0 0.0
    %881 = vmatprep.subr.mxu0 0.0
    %882 = vmatpush1.msra.mxu0 0.0
    %883 = vmatprep.subr.mxu0 0.0
    %884 = vmatpush1.msra.mxu0 0.0
    %885 = vmatprep.subr.mxu0 0.0
    %886 = vmatpush1.msra.mxu0 0.0
    %887 = vmatprep.subr.mxu0 0.0
    %888 = vmatpush1.msra.mxu0 0.0
    %889 = vmatprep.subr.mxu0 0.0
    %890 = vmatpush1.msra.mxu0 0.0
    %891 = vmatprep.subr.mxu0 0.0
    %892 = vmatpush1.msra.mxu0 0.0
    %893 = vmatprep.subr.mxu0 0.0
    %894 = vmatpush1.msra.mxu0 0.0
    %895 = vmatprep.subr.mxu0 0.0
    %896 = vmatpush1.msra.mxu0 0.0
    %897 = vmatprep.subr.mxu0 0.0
    %898 = vmatpush1.msra.mxu0 0.0
    %899 = vmatprep.subr.mxu0 0.0
    %900 = vmatpush1.msra.mxu0 0.0
    %901 = vmatprep.subr.mxu0 0.0
    %902 = vmatpush1.msra.mxu0 0.0
    %903 = vmatprep.subr.mxu0 0.0
    %904 = vmatpush1.msra.mxu0 0.0
    %905 = vmatprep.subr.mxu0 0.0
    %906 = vmatpush1.msra.mxu0 0.0
    %907 = vmatprep.subr.mxu0 0.0
    %908 = vmatpush1.msra.mxu0 0.0
    %909 = vmatprep.subr.mxu0 0.0
    %910 = vmatpush1.msra.mxu0 0.0
    %911 = vmatprep.mubr.f32.mxu0 0.0
    %912 = vmatmul.mubr.f32.gmra.mrb[0].mxu0 %v842
    %v913 = vpop.f32.mrb[0].mxu0
    %v914 = vadd.f32 %v840, %v913
    %v915 = vpop.f32.mrb[0].mxu0
    %916 = vdwg.mxu0
    %918 = vrot.lane.b32.xlu0 %v914, 124
    %v919 = vpop.permute.xlu0 %918
    %v920 = vsel %vm226, %v914, 0
    %v922 = vsel %vm226, %v919, 0
    %924 = vmatprep.subr.mxu0 0.0
    %925 = vmatpush1.xpose.msra.mxu0 %v922
    %926 = vmatprep.subr.mxu0 0.0
    %927 = vmatpush1.xpose.msra.mxu0 0.0
    %928 = vmatprep.subr.mxu0 0.0
    %929 = vmatpush1.xpose.msra.mxu0 0.0
    %930 = vmatprep.subr.mxu0 0.0
    %931 = vmatpush1.xpose.msra.mxu0 0.0
    %932 = vmatprep.subr.mxu0 0.0
    %933 = vmatpush1.xpose.msra.mxu0 0.0
    %934 = vmatprep.subr.mxu0 0.0
    %935 = vmatpush1.xpose.msra.mxu0 0.0
    %936 = vmatprep.subr.mxu0 0.0
    %937 = vmatpush1.xpose.msra.mxu0 0.0
    %938 = vmatprep.subr.mxu0 0.0
    %939 = vmatpush1.xpose.msra.mxu0 0.0
    %940 = vmatprep.subr.mxu0 0.0
    %941 = vmatpush1.xpose.msra.mxu0 0.0
    %942 = vmatprep.subr.mxu0 0.0
    %943 = vmatpush1.xpose.msra.mxu0 0.0
    %944 = vmatprep.subr.mxu0 0.0
    %945 = vmatpush1.xpose.msra.mxu0 0.0
    %946 = vmatprep.subr.mxu0 0.0
    %947 = vmatpush1.xpose.msra.mxu0 0.0
    %948 = vmatprep.subr.mxu0 0.0
    %949 = vmatpush1.xpose.msra.mxu0 0.0
    %950 = vmatprep.subr.mxu0 0.0
    %951 = vmatpush1.xpose.msra.mxu0 0.0
    %952 = vmatprep.subr.mxu0 0.0
    %953 = vmatpush1.xpose.msra.mxu0 0.0
    %954 = vmatprep.subr.mxu0 0.0
    %955 = vmatpush1.xpose.msra.mxu0 0.0
    %956 = vmatprep.subr.mxu0 0.0
    %957 = vmatpush1.xpose.msra.mxu0 0.0
    %958 = vmatprep.subr.mxu0 0.0
    %959 = vmatpush1.xpose.msra.mxu0 0.0
    %960 = vmatprep.subr.mxu0 0.0
    %961 = vmatpush1.xpose.msra.mxu0 0.0
    %962 = vmatprep.subr.mxu0 0.0
    %963 = vmatpush1.xpose.msra.mxu0 0.0
    %964 = vmatprep.subr.mxu0 0.0
    %965 = vmatpush1.xpose.msra.mxu0 0.0
    %966 = vmatprep.subr.mxu0 0.0
    %967 = vmatpush1.xpose.msra.mxu0 0.0
    %968 = vmatprep.subr.mxu0 0.0
    %969 = vmatpush1.xpose.msra.mxu0 0.0
    %970 = vmatprep.subr.mxu0 0.0
    %971 = vmatpush1.xpose.msra.mxu0 0.0
    %972 = vmatprep.subr.mxu0 0.0
    %973 = vmatpush1.xpose.msra.mxu0 0.0
    %974 = vmatprep.subr.mxu0 0.0
    %975 = vmatpush1.xpose.msra.mxu0 0.0
    %976 = vmatprep.subr.mxu0 0.0
    %977 = vmatpush1.xpose.msra.mxu0 0.0
    %978 = vmatprep.subr.mxu0 0.0
    %979 = vmatpush1.xpose.msra.mxu0 0.0
    %980 = vmatprep.subr.mxu0 0.0
    %981 = vmatpush1.xpose.msra.mxu0 0.0
    %982 = vmatprep.subr.mxu0 0.0
    %983 = vmatpush1.xpose.msra.mxu0 0.0
    %984 = vmatprep.subr.mxu0 0.0
    %985 = vmatpush1.xpose.msra.mxu0 0.0
    %986 = vmatprep.subr.mxu0 0.0
    %987 = vmatpush1.xpose.msra.mxu0 0.0
    %988 = vmatprep.mubr.f32.mxu0 0.0
    %989 = vmatmul.mubr.f32.gmra.mrb[0].mxu0 %v920
    %v990 = vpop.f32.mrb[0].mxu0
    %v991 = vadd.f32 0.0, %v990
    %v992 = vpop.f32.mrb[0].mxu0
    %993 = vdwg.mxu0
    %v994 = vmul.f32 %v991, 0.70710677
    %v995 = vadd.f32 %v994, %v143
    %v996 = vsel %vm303, %v995, -inf
    %997 = vmax.xlane.f32.xlu0 %v996
    %v998 = vpop.xlane.xlu0 %997
    %v999 = vsub.f32 %v995, %v998
    %v1000 = vmul.f32 %v999, 1.442695
    %v1001 = vpow.pop %v1000
    %v1002 = vsel %vm303, %v1001, 0.0
    %1003 = vadd.xlane.f32.xlu0 %v1002
    %v1004 = vpop.xlane.xlu0 %1003
    %v1005 = vrcp.pop %v1004
    %v1006 = vmul.f32 %v1001, %v1005
    %1007 = vrot.lane.b32.xlu0 %v914, 120
    %v1008 = vpop.permute.xlu0 %1007
    %v1011 = vsel %vm303, %v1006, 0
    %1013 = vmatprep.subr.mxu0 0.0
    %1014 = vmatpush1.msra.mxu0 %v1008
    %1015 = vmatprep.subr.mxu0 0.0
    %1016 = vmatpush1.msra.mxu0 0.0
    %1017 = vmatprep.subr.mxu0 0.0
    %1018 = vmatpush1.msra.mxu0 0.0
    %1019 = vmatprep.subr.mxu0 0.0
    %1020 = vmatpush1.msra.mxu0 0.0
    %1021 = vmatprep.subr.mxu0 0.0
    %1022 = vmatpush1.msra.mxu0 0.0
    %1023 = vmatprep.subr.mxu0 0.0
    %1024 = vmatpush1.msra.mxu0 0.0
    %1025 = vmatprep.subr.mxu0 0.0
    %1026 = vmatpush1.msra.mxu0 0.0
    %1027 = vmatprep.subr.mxu0 0.0
    %1028 = vmatpush1.msra.mxu0 0.0
    %1029 = vmatprep.subr.mxu0 0.0
    %1030 = vmatpush1.msra.mxu0 0.0
    %1031 = vmatprep.subr.mxu0 0.0
    %1032 = vmatpush1.msra.mxu0 0.0
    %1033 = vmatprep.subr.mxu0 0.0
    %1034 = vmatpush1.msra.mxu0 0.0
    %1035 = vmatprep.subr.mxu0 0.0
    %1036 = vmatpush1.msra.mxu0 0.0
    %1037 = vmatprep.subr.mxu0 0.0
    %1038 = vmatpush1.msra.mxu0 0.0
    %1039 = vmatprep.subr.mxu0 0.0
    %1040 = vmatpush1.msra.mxu0 0.0
    %1041 = vmatprep.subr.mxu0 0.0
    %1042 = vmatpush1.msra.mxu0 0.0
    %1043 = vmatprep.subr.mxu0 0.0
    %1044 = vmatpush1.msra.mxu0 0.0
    %1045 = vmatprep.subr.mxu0 0.0
    %1046 = vmatpush1.msra.mxu0 0.0
    %1047 = vmatprep.subr.mxu0 0.0
    %1048 = vmatpush1.msra.mxu0 0.0
    %1049 = vmatprep.subr.mxu0 0.0
    %1050 = vmatpush1.msra.mxu0 0.0
    %1051 = vmatprep.subr.mxu0 0.0
    %1052 = vmatpush1.msra.mxu0 0.0
    %1053 = vmatprep.subr.mxu0 0.0
    %1054 = vmatpush1.msra.mxu0 0.0
    %1055 = vmatprep.subr.mxu0 0.0
    %1056 = vmatpush1.msra.mxu0 0.0
    %1057 = vmatprep.subr.mxu0 0.0
    %1058 = vmatpush1.msra.mxu0 0.0
    %1059 = vmatprep.subr.mxu0 0.0
    %1060 = vmatpush1.msra.mxu0 0.0
    %1061 = vmatprep.subr.mxu0 0.0
    %1062 = vmatpush1.msra.mxu0 0.0
    %1063 = vmatprep.subr.mxu0 0.0
    %1064 = vmatpush1.msra.mxu0 0.0
    %1065 = vmatprep.subr.mxu0 0.0
    %1066 = vmatpush1.msra.mxu0 0.0
    %1067 = vmatprep.subr.mxu0 0.0
    %1068 = vmatpush1.msra.mxu0 0.0
    %1069 = vmatprep.subr.mxu0 0.0
    %1070 = vmatpush1.msra.mxu0 0.0
    %1071 = vmatprep.subr.mxu0 0.0
    %1072 = vmatpush1.msra.mxu0 0.0
    %1073 = vmatprep.subr.mxu0 0.0
    %1074 = vmatpush1.msra.mxu0 0.0
    %1075 = vmatprep.subr.mxu0 0.0
    %1076 = vmatpush1.msra.mxu0 0.0
    %1077 = vmatprep.mubr.f32.mxu0 0.0
    %1078 = vmatmul.mubr.f32.gmra.mrb[0].mxu0 %v1011
    %v1079 = vpop.f32.mrb[0].mxu0
    %v1080 = vadd.f32 0.0, %v1079
    %v1081 = vpop.f32.mrb[0].mxu0
    %1082 = vdwg.mxu0
    %1083 = vrot.lane.b32.xlu0 %v914, 126
    %v1084 = vpop.permute.xlu0 %1083
    %1085 = vrot.lane.b32.xlu0 %v914, 122
    %v1086 = vpop.permute.xlu0 %1085
    %v1087 = vsel %vm226, %v1084, 0
    %v1089 = vsel %vm226, %v1086, 0
    %1091 = vmatprep.subr.mxu0 0.0
    %1092 = vmatpush1.xpose.msra.mxu0 %v1089
    %1093 = vmatprep.subr.mxu0 0.0
    %1094 = vmatpush1.xpose.msra.mxu0 0.0
    %1095 = vmatprep.subr.mxu0 0.0
    %1096 = vmatpush1.xpose.msra.mxu0 0.0
    %1097 = vmatprep.subr.mxu0 0.0
    %1098 = vmatpush1.xpose.msra.mxu0 0.0
    %1099 = vmatprep.subr.mxu0 0.0
    %1100 = vmatpush1.xpose.msra.mxu0 0.0
    %1101 = vmatprep.subr.mxu0 0.0
    %1102 = vmatpush1.xpose.msra.mxu0 0.0
    %1103 = vmatprep.subr.mxu0 0.0
    %1104 = vmatpush1.xpose.msra.mxu0 0.0
    %1105 = vmatprep.subr.mxu0 0.0
    %1106 = vmatpush1.xpose.msra.mxu0 0.0
    %1107 = vmatprep.subr.mxu0 0.0
    %1108 = vmatpush1.xpose.msra.mxu0 0.0
    %1109 = vmatprep.subr.mxu0 0.0
    %1110 = vmatpush1.xpose.msra.mxu0 0.0
    %1111 = vmatprep.subr.mxu0 0.0
    %1112 = vmatpush1.xpose.msra.mxu0 0.0
    %1113 = vmatprep.subr.mxu0 0.0
    %1114 = vmatpush1.xpose.msra.mxu0 0.0
    %1115 = vmatprep.subr.mxu0 0.0
    %1116 = vmatpush1.xpose.msra.mxu0 0.0
    %1117 = vmatprep.subr.mxu0 0.0
    %1118 = vmatpush1.xpose.msra.mxu0 0.0
    %1119 = vmatprep.subr.mxu0 0.0
    %1120 = vmatpush1.xpose.msra.mxu0 0.0
    %1121 = vmatprep.subr.mxu0 0.0
    %1122 = vmatpush1.xpose.msra.mxu0 0.0
    %1123 = vmatprep.subr.mxu0 0.0
    %1124 = vmatpush1.xpose.msra.mxu0 0.0
    %1125 = vmatprep.subr.mxu0 0.0
    %1126 = vmatpush1.xpose.msra.mxu0 0.0
    %1127 = vmatprep.subr.mxu0 0.0
    %1128 = vmatpush1.xpose.msra.mxu0 0.0
    %1129 = vmatprep.subr.mxu0 0.0
    %1130 = vmatpush1.xpose.msra.mxu0 0.0
    %1131 = vmatprep.subr.mxu0 0.0
    %1132 = vmatpush1.xpose.msra.mxu0 0.0
    %1133 = vmatprep.subr.mxu0 0.0
    %1134 = vmatpush1.xpose.msra.mxu0 0.0
    %1135 = vmatprep.subr.mxu0 0.0
    %1136 = vmatpush1.xpose.msra.mxu0 0.0
    %1137 = vmatprep.subr.mxu0 0.0
    %1138 = vmatpush1.xpose.msra.mxu0 0.0
    %1139 = vmatprep.subr.mxu0 0.0
    %1140 = vmatpush1.xpose.msra.mxu0 0.0
    %1141 = vmatprep.subr.mxu0 0.0
    %1142 = vmatpush1.xpose.msra.mxu0 0.0
    %1143 = vmatprep.subr.mxu0 0.0
    %1144 = vmatpush1.xpose.msra.mxu0 0.0
    %1145 = vmatprep.subr.mxu0 0.0
    %1146 = vmatpush1.xpose.msra.mxu0 0.0
    %1147 = vmatprep.subr.mxu0 0.0
    %1148 = vmatpush1.xpose.msra.mxu0 0.0
    %1149 = vmatprep.subr.mxu0 0.0
    %1150 = vmatpush1.xpose.msra.mxu0 0.0
    %1151 = vmatprep.subr.mxu0 0.0
    %1152 = vmatpush1.xpose.msra.mxu0 0.0
    %1153 = vmatprep.subr.mxu0 0.0
    %1154 = vmatpush1.xpose.msra.mxu0 0.0
    %1155 = vmatprep.mubr.f32.mxu0 0.0
    %1156 = vmatmul.mubr.f32.gmra.mrb[0].mxu0 %v1087
    %v1157 = vpop.f32.mrb[0].mxu0
    %v1158 = vadd.f32 0.0, %v1157
    %v1159 = vpop.f32.mrb[0].mxu0
    %1160 = vdwg.mxu0
    %v1161 = vmul.f32 %v1158, 0.70710677
    %v1162 = vadd.f32 %v1161, %v143
    %v1163 = vsel %vm303, %v1162, -inf
    %1164 = vmax.xlane.f32.xlu0 %v1163
    %v1165 = vpop.xlane.xlu0 %1164
    %v1166 = vsub.f32 %v1162, %v1165
    %v1167 = vmul.f32 %v1166, 1.442695
    %v1168 = vpow.pop %v1167
    %v1169 = vsel %vm303, %v1168, 0.0
    %1170 = vadd.xlane.f32.xlu0 %v1169
    %v1171 = vpop.xlane.xlu0 %1170
    %v1172 = vrcp.pop %v1171
    %v1173 = vmul.f32 %v1168, %v1172
    %1174 = vrot.lane.b32.xlu0 %v914, 118
    %v1175 = vpop.permute.xlu0 %1174
    %v1178 = vsel %vm303, %v1173, 0
    %1180 = vmatprep.subr.mxu0 0.0
    %1181 = vmatpush1.msra.mxu0 %v1175
    %1182 = vmatprep.subr.mxu0 0.0
    %1183 = vmatpush1.msra.mxu0 0.0
    %1184 = vmatprep.subr.mxu0 0.0
    %1185 = vmatpush1.msra.mxu0 0.0
    %1186 = vmatprep.subr.mxu0 0.0
    %1187 = vmatpush1.msra.mxu0 0.0
    %1188 = vmatprep.subr.mxu0 0.0
    %1189 = vmatpush1.msra.mxu0 0.0
    %1190 = vmatprep.subr.mxu0 0.0
    %1191 = vmatpush1.msra.mxu0 0.0
    %1192 = vmatprep.subr.mxu0 0.0
    %1193 = vmatpush1.msra.mxu0 0.0
    %1194 = vmatprep.subr.mxu0 0.0
    %1195 = vmatpush1.msra.mxu0 0.0
    %1196 = vmatprep.subr.mxu0 0.0
    %1197 = vmatpush1.msra.mxu0 0.0
    %1198 = vmatprep.subr.mxu0 0.0
    %1199 = vmatpush1.msra.mxu0 0.0
    %1200 = vmatprep.subr.mxu0 0.0
    %1201 = vmatpush1.msra.mxu0 0.0
    %1202 = vmatprep.subr.mxu0 0.0
    %1203 = vmatpush1.msra.mxu0 0.0
    %1204 = vmatprep.subr.mxu0 0.0
    %1205 = vmatpush1.msra.mxu0 0.0
    %1206 = vmatprep.subr.mxu0 0.0
    %1207 = vmatpush1.msra.mxu0 0.0
    %1208 = vmatprep.subr.mxu0 0.0
    %1209 = vmatpush1.msra.mxu0 0.0
    %1210 = vmatprep.subr.mxu0 0.0
    %1211 = vmatpush1.msra.mxu0 0.0
    %1212 = vmatprep.subr.mxu0 0.0
    %1213 = vmatpush1.msra.mxu0 0.0
    %1214 = vmatprep.subr.mxu0 0.0
    %1215 = vmatpush1.msra.mxu0 0.0
    %1216 = vmatprep.subr.mxu0 0.0
    %1217 = vmatpush1.msra.mxu0 0.0
    %1218 = vmatprep.subr.mxu0 0.0
    %1219 = vmatpush1.msra.mxu0 0.0
    %1220 = vmatprep.subr.mxu0 0.0
    %1221 = vmatpush1.msra.mxu0 0.0
    %1222 = vmatprep.subr.mxu0 0.0
    %1223 = vmatpush1.msra.mxu0 0.0
    %1224 = vmatprep.subr.mxu0 0.0
    %1225 = vmatpush1.msra.mxu0 0.0
    %1226 = vmatprep.subr.mxu0 0.0
    %1227 = vmatpush1.msra.mxu0 0.0
    %1228 = vmatprep.subr.mxu0 0.0
    %1229 = vmatpush1.msra.mxu0 0.0
    %1230 = vmatprep.subr.mxu0 0.0
    %1231 = vmatpush1.msra.mxu0 0.0
    %1232 = vmatprep.subr.mxu0 0.0
    %1233 = vmatpush1.msra.mxu0 0.0
    %1234 = vmatprep.subr.mxu0 0.0
    %1235 = vmatpush1.msra.mxu0 0.0
    %1236 = vmatprep.subr.mxu0 0.0
    %1237 = vmatpush1.msra.mxu0 0.0
    %1238 = vmatprep.subr.mxu0 0.0
    %1239 = vmatpush1.msra.mxu0 0.0
    %1240 = vmatprep.subr.mxu0 0.0
    %1241 = vmatpush1.msra.mxu0 0.0
    %1242 = vmatprep.subr.mxu0 0.0
    %1243 = vmatpush1.msra.mxu0 0.0
    %1244 = vmatprep.mubr.f32.mxu0 0.0
    %1245 = vmatmul.mubr.f32.gmra.mrb[0].mxu0 %v1178
    %v1246 = vpop.f32.mrb[0].mxu0
    %v1247 = vadd.f32 0.0, %v1246
    %v1248 = vpop.f32.mrb[0].mxu0
    %1249 = vdwg.mxu0
    %1251 = vrot.lane.b32.xlu0 %v1247, 2
    %v1252 = vpop.permute.xlu0 %1251
    %v1254 = vsel %vm226, %v1080, %v1252
    %v1255 = vld [vmem:[#allocation2 + $0xd0] sm:$0xf]
    %v1256 = vld [vmem:[#allocation2 + $0xd8] sm:$0xff]
    %v1258 = vsel %vm116, %v1254, 0
    %v1261 = vsel %vm149, %v1255, 0
    %1263 = vmatprep.subr.mxu0 0.0
    %1264 = vmatpush1.msra.mxu0 %v1261
    %1265 = vmatprep.subr.mxu0 0.0
    %1266 = vmatpush1.msra.mxu0 0.0
    %1267 = vmatprep.subr.mxu0 0.0
    %1268 = vmatpush1.msra.mxu0 0.0
    %1269 = vmatprep.subr.mxu0 0.0
    %1270 = vmatpush1.msra.mxu0 0.0
    %1271 = vmatprep.subr.mxu0 0.0
    %1272 = vmatpush1.msra.mxu0 0.0
    %1273 = vmatprep.subr.mxu0 0.0
    %1274 = vmatpush1.msra.mxu0 0.0
    %1275 = vmatprep.subr.mxu0 0.0
    %1276 = vmatpush1.msra.mxu0 0.0
    %1277 = vmatprep.subr.mxu0 0.0
    %1278 = vmatpush1.msra.mxu0 0.0
    %1279 = vmatprep.subr.mxu0 0.0
    %1280 = vmatpush1.msra.mxu0 0.0
    %1281 = vmatprep.subr.mxu0 0.0
    %1282 = vmatpush1.msra.mxu0 0.0
    %1283 = vmatprep.subr.mxu0 0.0
    %1284 = vmatpush1.msra.mxu0 0.0
    %1285 = vmatprep.subr.mxu0 0.0
    %1286 = vmatpush1.msra.mxu0 0.0
    %1287 = vmatprep.subr.mxu0 0.0
    %1288 = vmatpush1.msra.mxu0 0.0
    %1289 = vmatprep.subr.mxu0 0.0
    %1290 = vmatpush1.msra.mxu0 0.0
    %1291 = vmatprep.subr.mxu0 0.0
    %1292 = vmatpush1.msra.mxu0 0.0
    %1293 = vmatprep.subr.mxu0 0.0
    %1294 = vmatpush1.msra.mxu0 0.0
    %1295 = vmatprep.subr.mxu0 0.0
    %1296 = vmatpush1.msra.mxu0 0.0
    %1297 = vmatprep.subr.mxu0 0.0
    %1298 = vmatpush1.msra.mxu0 0.0
    %1299 = vmatprep.subr.mxu0 0.0
    %1300 = vmatpush1.msra.mxu0 0.0
    %1301 = vmatprep.subr.mxu0 0.0
    %1302 = vmatpush1.msra.mxu0 0.0
    %1303 = vmatprep.subr.mxu0 0.0
    %1304 = vmatpush1.msra.mxu0 0.0
    %1305 = vmatprep.subr.mxu0 0.0
    %1306 = vmatpush1.msra.mxu0 0.0
    %1307 = vmatprep.subr.mxu0 0.0
    %1308 = vmatpush1.msra.mxu0 0.0
    %1309 = vmatprep.subr.mxu0 0.0
    %1310 = vmatpush1.msra.mxu0 0.0
    %1311 = vmatprep.subr.mxu0 0.0
    %1312 = vmatpush1.msra.mxu0 0.0
    %1313 = vmatprep.subr.mxu0 0.0
    %1314 = vmatpush1.msra.mxu0 0.0
    %1315 = vmatprep.subr.mxu0 0.0
    %1316 = vmatpush1.msra.mxu0 0.0
    %1317 = vmatprep.subr.mxu0 0.0
    %1318 = vmatpush1.msra.mxu0 0.0
    %1319 = vmatprep.subr.mxu0 0.0
    %1320 = vmatpush1.msra.mxu0 0.0
    %1321 = vmatprep.subr.mxu0 0.0
    %1322 = vmatpush1.msra.mxu0 0.0
    %1323 = vmatprep.subr.mxu0 0.0
    %1324 = vmatpush1.msra.mxu0 0.0
    %1325 = vmatprep.subr.mxu0 0.0
    %1326 = vmatpush1.msra.mxu0 0.0
    %1327 = vmatprep.mubr.f32.mxu0 0.0
    %1328 = vmatmul.mubr.f32.gmra.mrb[0].mxu0 %v1258
    %v1329 = vpop.f32.mrb[0].mxu0
    %v1330 = vadd.f32 %v1256, %v1329
    %v1331 = vpop.f32.mrb[0].mxu0
    %1332 = vdwg.mxu0
    %v1333 = vadd.f32 %v838, %v1330
    %v1334 = vld [vmem:[#allocation2 + $0xe0] sm:$0xff]
    %v1335 = vld [vmem:[#allocation2 + $0xe8] sm:$0xff]
    %v1336 = vsel %vm116, %v1333, 0.0
    %1337 = vadd.xlane.f32.xlu0 %v1336
    %v1338 = vpop.xlane.xlu0 %1337
    %v1339 = vmul.f32 %v1338, %v120
    %v1340 = vsub.f32 %v1333, %v1339
    %v1341 = vmul.f32 %v1340, %v1340
    %v1342 = vsel %vm116, %v1341, 0.0
    %1343 = vadd.xlane.f32.xlu0 %v1342
    %v1344 = vpop.xlane.xlu0 %1343
    %v1345 = vmul.f32 %v1344, %v120
    %v1346 = vadd.f32 %v1345, 1e-05
    %v1347 = vrsqrt.pop %v1346
    %v1348 = vmul.f32 %v1340, %v1347
    %v1349 = vmul.f32 %v1348, %v1334
    %v1350 = vadd.f32 %v1349, %v1335
    %v1351 = vld [vmem:[#allocation2 + $0xf0] sm:$0xf]
    %v1352 = vld [vmem:[#allocation2 + $0xf8] sm:$0xff]
    %v1354 = vsel %vm116, %v1350, 0
    %v1357 = vsel %vm149, %v1351, 0
    %1359 = vmatprep.subr.mxu0 0.0
    %1360 = vmatpush1.msra.mxu0 %v1357
    %1361 = vmatprep.subr.mxu0 0.0
    %1362 = vmatpush1.msra.mxu0 0.0
    %1363 = vmatprep.subr.mxu0 0.0
    %1364 = vmatpush1.msra.mxu0 0.0
    %1365 = vmatprep.subr.mxu0 0.0
    %1366 = vmatpush1.msra.mxu0 0.0
    %1367 = vmatprep.subr.mxu0 0.0
    %1368 = vmatpush1.msra.mxu0 0.0
    %1369 = vmatprep.subr.mxu0 0.0
    %1370 = vmatpush1.msra.mxu0 0.0
    %1371 = vmatprep.subr.mxu0 0.0
    %1372 = vmatpush1.msra.mxu0 0.0
    %1373 = vmatprep.subr.mxu0 0.0
    %1374 = vmatpush1.msra.mxu0 0.0
    %1375 = vmatprep.subr.mxu0 0.0
    %1376 = vmatpush1.msra.mxu0 0.0
    %1377 = vmatprep.subr.mxu0 0.0
    %1378 = vmatpush1.msra.mxu0 0.0
    %1379 = vmatprep.subr.mxu0 0.0
    %1380 = vmatpush1.msra.mxu0 0.0
    %1381 = vmatprep.subr.mxu0 0.0
    %1382 = vmatpush1.msra.mxu0 0.0
    %1383 = vmatprep.subr.mxu0 0.0
    %1384 = vmatpush1.msra.mxu0 0.0
    %1385 = vmatprep.subr.mxu0 0.0
    %1386 = vmatpush1.msra.mxu0 0.0
    %1387 = vmatprep.subr.mxu0 0.0
    %1388 = vmatpush1.msra.mxu0 0.0
    %1389 = vmatprep.subr.mxu0 0.0
    %1390 = vmatpush1.msra.mxu0 0.0
    %1391 = vmatprep.subr.mxu0 0.0
    %1392 = vmatpush1.msra.mxu0 0.0
    %1393 = vmatprep.subr.mxu0 0.0
    %1394 = vmatpush1.msra.mxu0 0.0
    %1395 = vmatprep.subr.mxu0 0.0
    %1396 = vmatpush1.msra.mxu0 0.0
    %1397 = vmatprep.subr.mxu0 0.0
    %1398 = vmatpush1.msra.mxu0 0.0
    %1399 = vmatprep.subr.mxu0 0.0
    %1400 = vmatpush1.msra.mxu0 0.0
    %1401 = vmatprep.subr.mxu0 0.0
    %1402 = vmatpush1.msra.mxu0 0.0
    %1403 = vmatprep.subr.mxu0 0.0
    %1404 = vmatpush1.msra.mxu0 0.0
    %1405 = vmatprep.subr.mxu0 0.0
    %1406 = vmatpush1.msra.mxu0 0.0
    %1407 = vmatprep.subr.mxu0 0.0
    %1408 = vmatpush1.msra.mxu0 0.0
    %1409 = vmatprep.subr.mxu0 0.0
    %1410 = vmatpush1.msra.mxu0 0.0
    %1411 = vmatprep.subr.mxu0 0.0
    %1412 = vmatpush1.msra.mxu0 0.0
    %1413 = vmatprep.subr.mxu0 0.0
    %1414 = vmatpush1.msra.mxu0 0.0
    %1415 = vmatprep.subr.mxu0 0.0
    %1416 = vmatpush1.msra.mxu0 0.0
    %1417 = vmatprep.subr.mxu0 0.0
    %1418 = vmatpush1.msra.mxu0 0.0
    %1419 = vmatprep.subr.mxu0 0.0
    %1420 = vmatpush1.msra.mxu0 0.0
    %1421 = vmatprep.subr.mxu0 0.0
    %1422 = vmatpush1.msra.mxu0 0.0
    %1423 = vmatprep.mubr.f32.mxu0 0.0
    %1424 = vmatmul.mubr.f32.gmra.mrb[0].mxu0 %v1354
    %v1425 = vpop.f32.mrb[0].mxu0
    %v1426 = vadd.f32 %v1352, %v1425
    %v1427 = vpop.f32.mrb[0].mxu0
    %1428 = vdwg.mxu0
    %v1429 = vmax.f32 %v1426, 0.0
    %v1430 = vld [vmem:[#allocation2 + $0x100] sm:$0xff]
    %v1431 = vld [vmem:[#allocation2 + $0x108] sm:$0xff]
    %v1432 = vld [vmem:[#allocation2 + $0x110] sm:$0xff]
    %v1433 = vld [vmem:[#allocation2 + $0x118] sm:$0xff]
    %v1434 = vld [vmem:[#allocation2 + $0x120] sm:$0xff]
    %v1435 = vld [vmem:[#allocation2 + $0x128] sm:$0xff]
    %v1436 = vld [vmem:[#allocation2 + $0x130] sm:$0xff]
    %v1437 = vld [vmem:[#allocation2 + $0x138] sm:$0xff]
    %v1438 = vld [vmem:[#allocation2 + $0x140] sm:$0xff]
    %v1440 = vsel %vm747, %v1429, 0
    %1442 = vmatprep.subr.mxu0 0.0
    %1443 = vmatpush1.msra.mxu0 %v1430
    %1444 = vmatprep.subr.mxu0 0.0
    %1445 = vmatpush1.msra.mxu0 %v1431
    %1446 = vmatprep.subr.mxu0 0.0
    %1447 = vmatpush1.msra.mxu0 %v1432
    %1448 = vmatprep.subr.mxu0 0.0
    %1449 = vmatpush1.msra.mxu0 %v1433
    %1450 = vmatprep.subr.mxu0 0.0
    %1451 = vmatpush1.msra.mxu0 %v1434
    %1452 = vmatprep.subr.mxu0 0.0
    %1453 = vmatpush1.msra.mxu0 %v1435
    %1454 = vmatprep.subr.mxu0 0.0
    %1455 = vmatpush1.msra.mxu0 %v1436
    %1456 = vmatprep.subr.mxu0 0.0
    %1457 = vmatpush1.msra.mxu0 %v1437
    %1458 = vmatprep.subr.mxu0 0.0
    %1459 = vmatpush1.msra.mxu0 0.0
    %1460 = vmatprep.subr.mxu0 0.0
    %1461 = vmatpush1.msra.mxu0 0.0
    %1462 = vmatprep.subr.mxu0 0.0
    %1463 = vmatpush1.msra.mxu0 0.0
    %1464 = vmatprep.subr.mxu0 0.0
    %1465 = vmatpush1.msra.mxu0 0.0
    %1466 = vmatprep.subr.mxu0 0.0
    %1467 = vmatpush1.msra.mxu0 0.0
    %1468 = vmatprep.subr.mxu0 0.0
    %1469 = vmatpush1.msra.mxu0 0.0
    %1470 = vmatprep.subr.mxu0 0.0
    %1471 = vmatpush1.msra.mxu0 0.0
    %1472 = vmatprep.subr.mxu0 0.0
    %1473 = vmatpush1.msra.mxu0 0.0
    %1474 = vmatprep.subr.mxu0 0.0
    %1475 = vmatpush1.msra.mxu0 0.0
    %1476 = vmatprep.subr.mxu0 0.0
    %1477 = vmatpush1.msra.mxu0 0.0
    %1478 = vmatprep.subr.mxu0 0.0
    %1479 = vmatpush1.msra.mxu0 0.0
    %1480 = vmatprep.subr.mxu0 0.0
    %1481 = vmatpush1.msra.mxu0 0.0
    %1482 = vmatprep.subr.mxu0 0.0
    %1483 = vmatpush1.msra.mxu0 0.0
    %1484 = vmatprep.subr.mxu0 0.0
    %1485 = vmatpush1.msra.mxu0 0.0
    %1486 = vmatprep.subr.mxu0 0.0
    %1487 = vmatpush1.msra.mxu0 0.0
    %1488 = vmatprep.subr.mxu0 0.0
    %1489 = vmatpush1.msra.mxu0 0.0
    %1490 = vmatprep.subr.mxu0 0.0
    %1491 = vmatpush1.msra.mxu0 0.0
    %1492 = vmatprep.subr.mxu0 0.0
    %1493 = vmatpush1.msra.mxu0 0.0
    %1494 = vmatprep.subr.mxu0 0.0
    %1495 = vmatpush1.msra.mxu0 0.0
    %1496 = vmatprep.subr.mxu0 0.0
    %1497 = vmatpush1.msra.mxu0 0.0
    %1498 = vmatprep.subr.mxu0 0.0
    %1499 = vmatpush1.msra.mxu0 0.0
    %1500 = vmatprep.subr.mxu0 0.0
    %1501 = vmatpush1.msra.mxu0 0.0
    %1502 = vmatprep.subr.mxu0 0.0
    %1503 = vmatpush1.msra.mxu0 0.0
    %1504 = vmatprep.subr.mxu0 0.0
    %1505 = vmatpush1.msra.mxu0 0.0
    %1506 = vmatprep.mubr.f32.mxu0 0.0
    %1507 = vmatmul.mubr.f32.gmra.mrb[0].mxu0 %v1440
    %v1508 = vpop.f32.mrb[0].mxu0
    %v1509 = vadd.f32 %v1438, %v1508
    %v1510 = vpop.f32.mrb[0].mxu0
    %1511 = vdwg.mxu0
    %v1512 = vadd.f32 %v1350, %v1509
    %v1513 = vld [vmem:[#allocation2 + $0x148] sm:$0xff]
    %v1514 = vld [vmem:[#allocation2 + $0x150] sm:$0xff]
    %v1515 = vsel %vm116, %v1512, 0.0
    %1516 = vadd.xlane.f32.xlu0 %v1515
    %v1517 = vpop.xlane.xlu0 %1516
    %v1518 = vmul.f32 %v1517, %v120
    %v1519 = vsub.f32 %v1512, %v1518
    %v1520 = vmul.f32 %v1519, %v1519
    %v1521 = vsel %vm116, %v1520, 0.0
    %1522 = vadd.xlane.f32.xlu0 %v1521
    %v1523 = vpop.xlane.xlu0 %1522
    %v1524 = vmul.f32 %v1523, %v120
    %v1525 = vadd.f32 %v1524, 1e-05
    %v1526 = vrsqrt.pop %v1525
    %v1527 = vmul.f32 %v1519, %v1526
    %v1528 = vmul.f32 %v1527, %v1513
    %v1529 = vadd.f32 %v1528, %v1514
    %v1530 = vld [vmem:[#allocation2 + $0x158] sm:$0xf]
    %v1531 = vld [vmem:[#allocation2 + $0x160] sm:$0xff]
    %v1533 = vsel %vm116, %v1529, 0
    %v1536 = vsel %vm149, %v1530, 0
    %1538 = vmatprep.subr.mxu0 0.0
    %1539 = vmatpush1.msra.mxu0 %v1536
    %1540 = vmatprep.subr.mxu0 0.0
    %1541 = vmatpush1.msra.mxu0 0.0
    %1542 = vmatprep.subr.mxu0 0.0
    %1543 = vmatpush1.msra.mxu0 0.0
    %1544 = vmatprep.subr.mxu0 0.0
    %1545 = vmatpush1.msra.mxu0 0.0
    %1546 = vmatprep.subr.mxu0 0.0
    %1547 = vmatpush1.msra.mxu0 0.0
    %1548 = vmatprep.subr.mxu0 0.0
    %1549 = vmatpush1.msra.mxu0 0.0
    %1550 = vmatprep.subr.mxu0 0.0
    %1551 = vmatpush1.msra.mxu0 0.0
    %1552 = vmatprep.subr.mxu0 0.0
    %1553 = vmatpush1.msra.mxu0 0.0
    %1554 = vmatprep.subr.mxu0 0.0
    %1555 = vmatpush1.msra.mxu0 0.0
    %1556 = vmatprep.subr.mxu0 0.0
    %1557 = vmatpush1.msra.mxu0 0.0
    %1558 = vmatprep.subr.mxu0 0.0
    %1559 = vmatpush1.msra.mxu0 0.0
    %1560 = vmatprep.subr.mxu0 0.0
    %1561 = vmatpush1.msra.mxu0 0.0
    %1562 = vmatprep.subr.mxu0 0.0
    %1563 = vmatpush1.msra.mxu0 0.0
    %1564 = vmatprep.subr.mxu0 0.0
    %1565 = vmatpush1.msra.mxu0 0.0
    %1566 = vmatprep.subr.mxu0 0.0
    %1567 = vmatpush1.msra.mxu0 0.0
    %1568 = vmatprep.subr.mxu0 0.0
    %1569 = vmatpush1.msra.mxu0 0.0
    %1570 = vmatprep.subr.mxu0 0.0
    %1571 = vmatpush1.msra.mxu0 0.0
    %1572 = vmatprep.subr.mxu0 0.0
    %1573 = vmatpush1.msra.mxu0 0.0
    %1574 = vmatprep.subr.mxu0 0.0
    %1575 = vmatpush1.msra.mxu0 0.0
    %1576 = vmatprep.subr.mxu0 0.0
    %1577 = vmatpush1.msra.mxu0 0.0
    %1578 = vmatprep.subr.mxu0 0.0
    %1579 = vmatpush1.msra.mxu0 0.0
    %1580 = vmatprep.subr.mxu0 0.0
    %1581 = vmatpush1.msra.mxu0 0.0
    %1582 = vmatprep.subr.mxu0 0.0
    %1583 = vmatpush1.msra.mxu0 0.0
    %1584 = vmatprep.subr.mxu0 0.0
    %1585 = vmatpush1.msra.mxu0 0.0
    %1586 = vmatprep.subr.mxu0 0.0
    %1587 = vmatpush1.msra.mxu0 0.0
    %1588 = vmatprep.subr.mxu0 0.0
    %1589 = vmatpush1.msra.mxu0 0.0
    %1590 = vmatprep.subr.mxu0 0.0
    %1591 = vmatpush1.msra.mxu0 0.0
    %1592 = vmatprep.subr.mxu0 0.0
    %1593 = vmatpush1.msra.mxu0 0.0
    %1594 = vmatprep.subr.mxu0 0.0
    %1595 = vmatpush1.msra.mxu0 0.0
    %1596 = vmatprep.subr.mxu0 0.0
    %1597 = vmatpush1.msra.mxu0 0.0
    %1598 = vmatprep.subr.mxu0 0.0
    %1599 = vmatpush1.msra.mxu0 0.0
    %1600 = vmatprep.subr.mxu0 0.0
    %1601 = vmatpush1.msra.mxu0 0.0
    %1602 = vmatprep.mubr.f32.mxu0 0.0
    %1603 = vmatmul.mubr.f32.gmra.mrb[0].mxu0 %v1533
    %v1604 = vpop.f32.mrb[0].mxu0
    %v1605 = vadd.f32 %v1531, %v1604
    %v1606 = vpop.f32.mrb[0].mxu0
    %1607 = vdwg.mxu0
    %1608 = vst [vmem:[%s3] sm:$0xff] %v1605
    // Predicated region
    $region18: #{forward.1} parent=1 // pred_check
      _
    $region19: #{forward.1} parent=1 // pred_check_branch
      %1610 = sbr.rel (0) target = $region21
    $region20: #{forward.1} parent=1 // pred_region
      _
    $region21: #{forward.1} parent=1 // pred_fallthru
      _
    // Predicated region
    $region22: #{forward.1} parent=1 // pred_check
      _
    $region23: #{forward.1} parent=1 // pred_check_branch
      %1612 = sbr.rel (0) target = $region25
    $region24: #{forward.1} parent=1 // pred_region
      _
    $region25: #{forward.1} parent=1 // pred_fallthru
      _
    %1613 = vsyncpa [#allocation3], 1

</llo_original>
